<compile_context>
chip_gen: v7x
topology: tpu7x:2x2x1
jax: 0.10.0
libtpu: 0.0.40
codegen_flags: <defaults>
</compile_context>

<pallas_src>
import jax
import jax.numpy as jnp
from jax.experimental import pallas as pl
from jax.experimental.pallas import tpu as pltpu

LANES = 128
SUBLANES = 8


def _round_up(n, m):
    return ((n + m - 1) // m) * m


def qnet_kernel(x_ref, w0_ref, b0_ref, w1_ref, b1_ref, w2_ref, b2_ref, o_ref):
    # In-kernel cast of x to the MXU dtype (VPU op, hidden under DMA/MXU slack).
    x = x_ref[...].astype(w0_ref.dtype)
    # layer0 + tanh  (bf16 MXU matmul, f32 accumulate / bias / tanh)
    h0 = jnp.tanh(
        jnp.dot(x, w0_ref[...], preferred_element_type=jnp.float32) + b0_ref[...]
    )
    # layer1 + tanh
    h1 = jnp.tanh(
        jnp.dot(h0.astype(w1_ref.dtype), w1_ref[...],
                preferred_element_type=jnp.float32)
        + b1_ref[...]
    )
    # layer2 (no activation) -- fully f32 (tiny matmul, exact given h1).
    o_ref[...] = (
        jnp.dot(h1, w2_ref[...], preferred_element_type=jnp.float32) + b2_ref[...]
    ).astype(o_ref.dtype)


def qnet_forward(x, params, *, compute_dtype=jnp.bfloat16,
                 block_rows=2048, single_step_max=4096):
    """x: (B, station_size) float32. params: dict of transposed weights / biases.

    Returns (B, action_size) float32 Q-values.
    """
    w0 = params["w0"].astype(compute_dtype)
    w1 = params["w1"].astype(compute_dtype)
    w2 = params["w2"].astype(jnp.float32)     # layer2 stays f32 (see header)
    b0 = params["b0"].astype(jnp.float32)
    b1 = params["b1"].astype(jnp.float32)
    b2 = params["b2"].astype(jnp.float32)

    B, S = x.shape
    H = w0.shape[1]
    A = w2.shape[1]

    # ---- adaptive batch tiling ------------------------------------------------
    B8 = _round_up(max(B, SUBLANES), SUBLANES)
    if B8 <= single_step_max:
        # One grid step: nothing for a pipeline to hide at this size.
        tile = B8
    else:
        # Large replay batch: even number of parallel steps (v7x dual-TC).
        n_steps = pl.cdiv(B8, block_rows)
        n_steps = _round_up(n_steps, 2)
        tile = _round_up(pl.cdiv(B8, n_steps), SUBLANES)
    B_pad = _round_up(B8, tile)
    grid = (B_pad // tile,)

    xp = x  # stays f32 -- cast happens inside the kernel
    if B_pad != B:
        xp = jnp.pad(xp, ((0, B_pad - B), (0, 0)))

    # Advisory cost estimate for the surrounding jitted training step.
    flops = 2 * B_pad * (S * H + H * H + H * A)
    bytes_accessed = (
        xp.size * xp.dtype.itemsize
        + w0.size * w0.dtype.itemsize
        + w1.size * w1.dtype.itemsize
        + w2.size * w2.dtype.itemsize
        + (b0.size + b1.size + b2.size) * 4
        + B_pad * A * 4
    )
    cost = pl.CostEstimate(
        flops=flops, transcendentals=2 * B_pad * H, bytes_accessed=bytes_accessed
    )

    # Weights/biases: constant index_map -> fetched once, stay VMEM-resident.
    resident = lambda shape: pl.BlockSpec(shape, lambda i: (0, 0))

    out = pl.pallas_call(
        qnet_kernel,
        out_shape=jax.ShapeDtypeStruct((B_pad, A), jnp.float32),
        grid=grid,
        in_specs=[
            pl.BlockSpec((tile, S), lambda i: (i, 0)),   # x: tiled over batch
            resident(w0.shape), resident(b0.shape),
            resident(w1.shape), resident(b1.shape),
            resident(w2.shape), resident(b2.shape),
        ],
        # (tile, A): last dim equals the full array dim -> legal, no lane padding.
        out_specs=pl.BlockSpec((tile, A), lambda i: (i, 0)),
        compiler_params=pltpu.CompilerParams(
            dimension_semantics=("parallel",),
        ),
        cost_estimate=cost,
    )(xp, w0, b0, w1, b1, w2, b2)

    return out[:B] if B_pad != B else out


def qnet_reference(x, params, compute_dtype=jnp.bfloat16):
    """Pure-JAX reference mirroring the kernel's precision choices."""
    w0 = params["w0"].astype(compute_dtype)
    w1 = params["w1"].astype(compute_dtype)
    h0 = jnp.tanh(
        jnp.dot(x.astype(compute_dtype), w0, preferred_element_type=jnp.float32)
        + params["b0"]
    )
    h1 = jnp.tanh(
        jnp.dot(h0.astype(compute_dtype), w1, preferred_element_type=jnp.float32)
        + params["b1"]
    )
    return jnp.dot(h1, params["w2"], preferred_element_type=jnp.float32) + params["b2"]


def qnet_reference_f32(x, params):
    """Full-f32 reference == PyTorch module semantics."""
    h0 = jnp.tanh(x @ params["w0"] + params["b0"])
    h1 = jnp.tanh(h0 @ params["w1"] + params["b1"])
    return h1 @ params["w2"] + params["b2"]


def init_qnet_params(key, station_size, hidden_layer, action_size):
    """PyTorch Linear default init (U[-1/sqrt(in), 1/sqrt(in)]).
    Weights stored transposed: (in_features, out_features)."""
    def linear(key, fan_in, fan_out):
        kw, kb = jax.random.split(key)
        bound = 1.0 / jnp.sqrt(float(fan_in))
        w = jax.random.uniform(kw, (fan_in, fan_out), jnp.float32, -bound, bound)
        b = jax.random.uniform(kb, (1, fan_out), jnp.float32, -bound, bound)
        return w, b

    k0, k1, k2 = jax.random.split(key, 3)
    w0, b0 = linear(k0, station_size, hidden_layer)
    w1, b1 = linear(k1, hidden_layer, hidden_layer)
    w2, b2 = linear(k2, hidden_layer, action_size)
    return {"w0": w0, "b0": b0, "w1": w1, "b1": b1, "w2": w2, "b2": b2}


if __name__ == "__main__":
    key = jax.random.PRNGKey(0)
    k_params, k_x = jax.random.split(key)

    station_size = 16   # input_space
    hidden_layer = 32
    action_size = 4     # out_space

    params = init_qnet_params(k_params, station_size, hidden_layer, action_size)

    def check(out, x, batch):
        assert out.shape == (batch, action_size)
        ref = qnet_reference(x, params)
        assert jnp.allclose(out, ref, atol=1e-2, rtol=1e-2), (
            f"mismatch vs bf16 reference at batch={batch}"
        )
        ref32 = qnet_reference_f32(x, params)
        assert jnp.allclose(out, ref32, atol=5e-2, rtol=5e-2), (
            f"mismatch vs f32 reference at batch={batch}"
        )

    # Single-grid-step path (the common case): exact-multiple, padded, tiny batches.
    for batch in (1024, 100, 8):
        xk = jax.random.fold_in(k_x, batch)
        x = jax.random.normal(xk, (batch, station_size), jnp.float32)
        out = jax.block_until_ready(qnet_forward(x, params))
        check(out, x, batch)

    # Multi-step "large replay batch" path (forced with small thresholds so the
    # test stays small): even number of parallel grid steps + row padding.
    batch = 200
    x = jax.random.normal(jax.random.fold_in(k_x, 7), (batch, station_size),
                          jnp.float32)
    out = jax.block_until_ready(
        qnet_forward(x, params, block_rows=64, single_step_max=64)
    )
    check(out, x, batch)

    print("KERNEL_OK")
</pallas_src>

<mosaic_0001>
module attributes {stable_mosaic.version = 11 : i64} {
  func.func @qnet_kernel(%arg0: i32, %arg1: memref<1024x16xf32, #tpu.memory_space<vmem>>, %arg2: memref<16x32xbf16, #tpu.memory_space<vmem>>, %arg3: memref<1x32xf32, #tpu.memory_space<vmem>>, %arg4: memref<32x32xbf16, #tpu.memory_space<vmem>>, %arg5: memref<1x32xf32, #tpu.memory_space<vmem>>, %arg6: memref<32x4xf32, #tpu.memory_space<vmem>>, %arg7: memref<1x4xf32, #tpu.memory_space<vmem>>, %arg8: memref<1024x4xf32, #tpu.memory_space<vmem>>) attributes {dimension_semantics = [#tpu.dimension_semantics<parallel>], iteration_bounds = array<i64: 1>, scalar_prefetch = 0 : i64, scratch_operands = 0 : i64, tpu.core_type = #tpu.core_type<tc>, window_params = [{transform_indices = @transform_0, window_bounds = array<i64: 1024, 16>}, {pipeline_mode = #tpu.pipeline_mode<synchronous>, transform_indices = @transform_1, window_bounds = array<i64: 16, 32>}, {pipeline_mode = #tpu.pipeline_mode<synchronous>, transform_indices = @transform_2, window_bounds = array<i64: 1, 32>}, {pipeline_mode = #tpu.pipeline_mode<synchronous>, transform_indices = @transform_3, window_bounds = array<i64: 32, 32>}, {pipeline_mode = #tpu.pipeline_mode<synchronous>, transform_indices = @transform_4, window_bounds = array<i64: 1, 32>}, {pipeline_mode = #tpu.pipeline_mode<synchronous>, transform_indices = @transform_5, window_bounds = array<i64: 32, 4>}, {pipeline_mode = #tpu.pipeline_mode<synchronous>, transform_indices = @transform_6, window_bounds = array<i64: 1, 4>}, {transform_indices = @transform_7, window_bounds = array<i64: 1024, 4>}]} {
    %c0 = arith.constant 0 : index
    %c0_0 = arith.constant 0 : index
    %0 = vector.load %arg1[%c0, %c0_0] : memref<1024x16xf32, #tpu.memory_space<vmem>>, vector<1024x16xf32>
    %1 = arith.truncf %0 : vector<1024x16xf32> to vector<1024x16xbf16>
    %c0_1 = arith.constant 0 : index
    %c0_2 = arith.constant 0 : index
    %2 = vector.load %arg2[%c0_1, %c0_2] : memref<16x32xbf16, #tpu.memory_space<vmem>>, vector<16x32xbf16>
    %cst = arith.constant dense<0.000000e+00> : vector<1024x32xf32>
    %3 = tpu.matmul %1, %2, %cst {dimension_numbers = #tpu.dot_dimension_numbers<[1], [0], [0], [1], [0, 0, 1, 1], [], []>} : vector<1024x16xbf16>, vector<16x32xbf16>, vector<1024x32xf32> -> vector<1024x32xf32>
    %c0_3 = arith.constant 0 : index
    %c0_4 = arith.constant 0 : index
    %4 = vector.load %arg3[%c0_3, %c0_4] : memref<1x32xf32, #tpu.memory_space<vmem>>, vector<1x32xf32>
    %5 = vector.broadcast %4 : vector<1x32xf32> to vector<1024x32xf32>
    %6 = arith.addf %3, %5 : vector<1024x32xf32>
    %7 = math.tanh %6 : vector<1024x32xf32>
    %8 = arith.truncf %7 : vector<1024x32xf32> to vector<1024x32xbf16>
    %c0_5 = arith.constant 0 : index
    %c0_6 = arith.constant 0 : index
    %9 = vector.load %arg4[%c0_5, %c0_6] : memref<32x32xbf16, #tpu.memory_space<vmem>>, vector<32x32xbf16>
    %cst_7 = arith.constant dense<0.000000e+00> : vector<1024x32xf32>
    %10 = tpu.matmul %8, %9, %cst_7 {dimension_numbers = #tpu.dot_dimension_numbers<[1], [0], [0], [1], [0, 0, 1, 1], [], []>} : vector<1024x32xbf16>, vector<32x32xbf16>, vector<1024x32xf32> -> vector<1024x32xf32>
    %c0_8 = arith.constant 0 : index
    %c0_9 = arith.constant 0 : index
    %11 = vector.load %arg5[%c0_8, %c0_9] : memref<1x32xf32, #tpu.memory_space<vmem>>, vector<1x32xf32>
    %12 = vector.broadcast %11 : vector<1x32xf32> to vector<1024x32xf32>
    %13 = arith.addf %10, %12 : vector<1024x32xf32>
    %14 = math.tanh %13 : vector<1024x32xf32>
    %c0_10 = arith.constant 0 : index
    %c0_11 = arith.constant 0 : index
    %15 = vector.load %arg6[%c0_10, %c0_11] : memref<32x4xf32, #tpu.memory_space<vmem>>, vector<32x4xf32>
    %cst_12 = arith.constant dense<0.000000e+00> : vector<1024x4xf32>
    %16 = tpu.matmul %14, %15, %cst_12 {dimension_numbers = #tpu.dot_dimension_numbers<[1], [0], [0], [1], [0, 0, 1, 1], [], []>} : vector<1024x32xf32>, vector<32x4xf32>, vector<1024x4xf32> -> vector<1024x4xf32>
    %c0_13 = arith.constant 0 : index
    %c0_14 = arith.constant 0 : index
    %17 = vector.load %arg7[%c0_13, %c0_14] : memref<1x4xf32, #tpu.memory_space<vmem>>, vector<1x4xf32>
    %18 = vector.broadcast %17 : vector<1x4xf32> to vector<1024x4xf32>
    %19 = arith.addf %16, %18 : vector<1024x4xf32>
    %c0_15 = arith.constant 0 : index
    %c0_16 = arith.constant 0 : index
    %20 = vector.load %arg8[%c0_15, %c0_16] : memref<1024x4xf32, #tpu.memory_space<vmem>>, vector<1024x4xf32>
    tpu.vector_store %arg8[%c0_15, %c0_16], %19 {strides = array<i32>} : memref<1024x4xf32, #tpu.memory_space<vmem>>, vector<1024x4xf32>,
    return
  }
  func.func @transform_0(%arg0: i32) -> (i32, i32) {
    %c0_i32 = arith.constant 0 : i32
    %c0_i32_0 = arith.constant 0 : i32
    return %arg0, %c0_i32 : i32, i32
  }
  func.func @transform_1(%arg0: i32) -> (i32, i32) {
    %c0_i32 = arith.constant 0 : i32
    %c0_i32_0 = arith.constant 0 : i32
    %c0_i32_1 = arith.constant 0 : i32
    return %c0_i32, %c0_i32_0 : i32, i32
  }
  func.func @transform_2(%arg0: i32) -> (i32, i32) {
    %c0_i32 = arith.constant 0 : i32
    %c0_i32_0 = arith.constant 0 : i32
    %c0_i32_1 = arith.constant 0 : i32
    return %c0_i32, %c0_i32_0 : i32, i32
  }
  func.func @transform_3(%arg0: i32) -> (i32, i32) {
    %c0_i32 = arith.constant 0 : i32
    %c0_i32_0 = arith.constant 0 : i32
    %c0_i32_1 = arith.constant 0 : i32
    return %c0_i32, %c0_i32_0 : i32, i32
  }
  func.func @transform_4(%arg0: i32) -> (i32, i32) {
    %c0_i32 = arith.constant 0 : i32
    %c0_i32_0 = arith.constant 0 : i32
    %c0_i32_1 = arith.constant 0 : i32
    return %c0_i32, %c0_i32_0 : i32, i32
  }
  func.func @transform_5(%arg0: i32) -> (i32, i32) {
    %c0_i32 = arith.constant 0 : i32
    %c0_i32_0 = arith.constant 0 : i32
    %c0_i32_1 = arith.constant 0 : i32
    return %c0_i32, %c0_i32_0 : i32, i32
  }
  func.func @transform_6(%arg0: i32) -> (i32, i32) {
    %c0_i32 = arith.constant 0 : i32
    %c0_i32_0 = arith.constant 0 : i32
    %c0_i32_1 = arith.constant 0 : i32
    return %c0_i32, %c0_i32_0 : i32, i32
  }
  func.func @transform_7(%arg0: i32) -> (i32, i32) {
    %c0_i32 = arith.constant 0 : i32
    %c0_i32_0 = arith.constant 0 : i32
    return %arg0, %c0_i32 : i32, i32
  }
}

</mosaic_0001>

<llo_original>
// kernel: tpu_custom_call.1
$region0: #{tpu_custom_call.1}
  #allocation0 [shape = 'u32[]', space=smem, size = 0x4, offset = 0x4, fixed_abs, tag = 'smem constant byte address 0x4 - core index']
  #allocation1 [shape = 'u32[144,128]{1,0:T(1,128)}', space=vmem, size = 0x12000, scoped, tag = 'internal scratch']
  %s0 = inlined_call_operand.vmem [shape: f32[1024,16], index: 0, kind: input, shape index: {}]
  %s1 = inlined_call_operand.vmem [shape: bf16[16,32], index: 1, kind: input, shape index: {}]
  %s2 = inlined_call_operand.vmem [shape: f32[1,32], index: 2, kind: input, shape index: {}]
  %s3 = inlined_call_operand.vmem [shape: bf16[32,32], index: 3, kind: input, shape index: {}]
  %s4 = inlined_call_operand.vmem [shape: f32[1,32], index: 4, kind: input, shape index: {}]
  %s5 = inlined_call_operand.vmem [shape: f32[32,4], index: 5, kind: input, shape index: {}]
  %s6 = inlined_call_operand.vmem [shape: f32[1,4], index: 6, kind: input, shape index: {}]
  %s7 = inlined_call_operand.vmem [shape: f32[1024,4], index: 7, kind: output, shape index: {}]
  %s8 = sld [smem:[#allocation0]]
  $region38: #{tpu_custom_call.1} parent=0
    _
  %s10 = ssub.s32 1, %s8
  %s11 = scalar_select 0, %s10, %s8
  // Predicated region
  $region2: #{tpu_custom_call.1} parent=0 // pred_check
    _
  $region3: #{tpu_custom_call.1} parent=0 // pred_check_branch
    %13 = sbr.rel (0) target = $region5
  $region4: #{tpu_custom_call.1} parent=0 // pred_region
    _
  $region5: #{tpu_custom_call.1} parent=0 // pred_fallthru
    _
  // Predicated region
  $region6: #{tpu_custom_call.1} parent=0 // pred_check
    _
  $region7: #{tpu_custom_call.1} parent=0 // pred_check_branch
    %15 = sbr.rel (0) target = $region9
  $region8: #{tpu_custom_call.1} parent=0 // pred_region
    _
  $region9: #{tpu_custom_call.1} parent=0 // pred_fallthru
    _
  // Predicated region
  $region10: #{tpu_custom_call.1} parent=0 // pred_check
    _
  $region11: #{tpu_custom_call.1} parent=0 // pred_check_branch
    %17 = sbr.rel (0) target = $region13
  $region12: #{tpu_custom_call.1} parent=0 // pred_region
    _
  $region13: #{tpu_custom_call.1} parent=0 // pred_fallthru
    _
  // Predicated region
  $region14: #{tpu_custom_call.1} parent=0 // pred_check
    _
  $region15: #{tpu_custom_call.1} parent=0 // pred_check_branch
    %19 = sbr.rel (0) target = $region17
  $region16: #{tpu_custom_call.1} parent=0 // pred_region
    _
  $region17: #{tpu_custom_call.1} parent=0 // pred_fallthru
    _
  // Predicated region
  $region18: #{tpu_custom_call.1} parent=0 // pred_check
    _
  $region19: #{tpu_custom_call.1} parent=0 // pred_check_branch
    %21 = sbr.rel (0) target = $region21
  $region20: #{tpu_custom_call.1} parent=0 // pred_region
    _
  $region21: #{tpu_custom_call.1} parent=0 // pred_fallthru
    _
  // Predicated region
  $region22: #{tpu_custom_call.1} parent=0 // pred_check
    _
  $region23: #{tpu_custom_call.1} parent=0 // pred_check_branch
    %23 = sbr.rel (0) target = $region25
  $region24: #{tpu_custom_call.1} parent=0 // pred_region
    _
  $region25: #{tpu_custom_call.1} parent=0 // pred_fallthru
    _
  // Predicated region
  $region26: #{tpu_custom_call.1} parent=0 // pred_check
    _
  $region27: #{tpu_custom_call.1} parent=0 // pred_check_branch
    %25 = sbr.rel (0) target = $region29
  $region28: #{tpu_custom_call.1} parent=0 // pred_region
    _
  $region29: #{tpu_custom_call.1} parent=0 // pred_fallthru
    _
  %v27 = vld [vmem:[%s0] sm:$0xff]
  %v28 = vld [vmem:[%s0 + $0x8] sm:$0xff]
  %v29 = vld [vmem:[%s0 + $0x10] sm:$0xff]
  %v30 = vld [vmem:[%s0 + $0x18] sm:$0xff]
  %v31 = vld [vmem:[%s0 + $0x20] sm:$0xff]
  %v32 = vld [vmem:[%s0 + $0x28] sm:$0xff]
  %v33 = vld [vmem:[%s0 + $0x30] sm:$0xff]
  %v34 = vld [vmem:[%s0 + $0x38] sm:$0xff]
  %v35 = vld [vmem:[%s0 + $0x40] sm:$0xff]
  %v36 = vld [vmem:[%s0 + $0x48] sm:$0xff]
  %v37 = vld [vmem:[%s0 + $0x50] sm:$0xff]
  %v38 = vld [vmem:[%s0 + $0x58] sm:$0xff]
  %v39 = vld [vmem:[%s0 + $0x60] sm:$0xff]
  %v40 = vld [vmem:[%s0 + $0x68] sm:$0xff]
  %v41 = vld [vmem:[%s0 + $0x70] sm:$0xff]
  %v42 = vld [vmem:[%s0 + $0x78] sm:$0xff]
  %v43 = vld [vmem:[%s0 + $0x80] sm:$0xff]
  %v44 = vld [vmem:[%s0 + $0x88] sm:$0xff]
  %v45 = vld [vmem:[%s0 + $0x90] sm:$0xff]
  %v46 = vld [vmem:[%s0 + $0x98] sm:$0xff]
  %v47 = vld [vmem:[%s0 + $0xa0] sm:$0xff]
  %v48 = vld [vmem:[%s0 + $0xa8] sm:$0xff]
  %v49 = vld [vmem:[%s0 + $0xb0] sm:$0xff]
  %v50 = vld [vmem:[%s0 + $0xb8] sm:$0xff]
  %v51 = vld [vmem:[%s0 + $0xc0] sm:$0xff]
  %v52 = vld [vmem:[%s0 + $0xc8] sm:$0xff]
  %v53 = vld [vmem:[%s0 + $0xd0] sm:$0xff]
  %v54 = vld [vmem:[%s0 + $0xd8] sm:$0xff]
  %v55 = vld [vmem:[%s0 + $0xe0] sm:$0xff]
  %v56 = vld [vmem:[%s0 + $0xe8] sm:$0xff]
  %v57 = vld [vmem:[%s0 + $0xf0] sm:$0xff]
  %v58 = vld [vmem:[%s0 + $0xf8] sm:$0xff]
  %v59 = vld [vmem:[%s0 + $0x100] sm:$0xff]
  %v60 = vld [vmem:[%s0 + $0x108] sm:$0xff]
  %v61 = vld [vmem:[%s0 + $0x110] sm:$0xff]
  %v62 = vld [vmem:[%s0 + $0x118] sm:$0xff]
  %v63 = vld [vmem:[%s0 + $0x120] sm:$0xff]
  %v64 = vld [vmem:[%s0 + $0x128] sm:$0xff]
  %v65 = vld [vmem:[%s0 + $0x130] sm:$0xff]
  %v66 = vld [vmem:[%s0 + $0x138] sm:$0xff]
  %v67 = vld [vmem:[%s0 + $0x140] sm:$0xff]
  %v68 = vld [vmem:[%s0 + $0x148] sm:$0xff]
  %v69 = vld [vmem:[%s0 + $0x150] sm:$0xff]
  %v70 = vld [vmem:[%s0 + $0x158] sm:$0xff]
  %v71 = vld [vmem:[%s0 + $0x160] sm:$0xff]
  %v72 = vld [vmem:[%s0 + $0x168] sm:$0xff]
  %v73 = vld [vmem:[%s0 + $0x170] sm:$0xff]
  %v74 = vld [vmem:[%s0 + $0x178] sm:$0xff]
  %v75 = vld [vmem:[%s0 + $0x180] sm:$0xff]
  %v76 = vld [vmem:[%s0 + $0x188] sm:$0xff]
  %v77 = vld [vmem:[%s0 + $0x190] sm:$0xff]
  %v78 = vld [vmem:[%s0 + $0x198] sm:$0xff]
  %v79 = vld [vmem:[%s0 + $0x1a0] sm:$0xff]
  %v80 = vld [vmem:[%s0 + $0x1a8] sm:$0xff]
  %v81 = vld [vmem:[%s0 + $0x1b0] sm:$0xff]
  %v82 = vld [vmem:[%s0 + $0x1b8] sm:$0xff]
  %v83 = vld [vmem:[%s0 + $0x1c0] sm:$0xff]
  %v84 = vld [vmem:[%s0 + $0x1c8] sm:$0xff]
  %v85 = vld [vmem:[%s0 + $0x1d0] sm:$0xff]
  %v86 = vld [vmem:[%s0 + $0x1d8] sm:$0xff]
  %v87 = vld [vmem:[%s0 + $0x1e0] sm:$0xff]
  %v88 = vld [vmem:[%s0 + $0x1e8] sm:$0xff]
  %v89 = vld [vmem:[%s0 + $0x1f0] sm:$0xff]
  %v90 = vld [vmem:[%s0 + $0x1f8] sm:$0xff]
  %v91 = vld [vmem:[%s0 + $0x200] sm:$0xff]
  %v92 = vld [vmem:[%s0 + $0x208] sm:$0xff]
  %v93 = vld [vmem:[%s0 + $0x210] sm:$0xff]
  %v94 = vld [vmem:[%s0 + $0x218] sm:$0xff]
  %v95 = vld [vmem:[%s0 + $0x220] sm:$0xff]
  %v96 = vld [vmem:[%s0 + $0x228] sm:$0xff]
  %v97 = vld [vmem:[%s0 + $0x230] sm:$0xff]
  %v98 = vld [vmem:[%s0 + $0x238] sm:$0xff]
  %v99 = vld [vmem:[%s0 + $0x240] sm:$0xff]
  %v100 = vld [vmem:[%s0 + $0x248] sm:$0xff]
  %v101 = vld [vmem:[%s0 + $0x250] sm:$0xff]
  %v102 = vld [vmem:[%s0 + $0x258] sm:$0xff]
  %v103 = vld [vmem:[%s0 + $0x260] sm:$0xff]
  %v104 = vld [vmem:[%s0 + $0x268] sm:$0xff]
  %v105 = vld [vmem:[%s0 + $0x270] sm:$0xff]
  %v106 = vld [vmem:[%s0 + $0x278] sm:$0xff]
  %v107 = vld [vmem:[%s0 + $0x280] sm:$0xff]
  %v108 = vld [vmem:[%s0 + $0x288] sm:$0xff]
  %v109 = vld [vmem:[%s0 + $0x290] sm:$0xff]
  %v110 = vld [vmem:[%s0 + $0x298] sm:$0xff]
  %v111 = vld [vmem:[%s0 + $0x2a0] sm:$0xff]
  %v112 = vld [vmem:[%s0 + $0x2a8] sm:$0xff]
  %v113 = vld [vmem:[%s0 + $0x2b0] sm:$0xff]
  %v114 = vld [vmem:[%s0 + $0x2b8] sm:$0xff]
  %v115 = vld [vmem:[%s0 + $0x2c0] sm:$0xff]
  %v116 = vld [vmem:[%s0 + $0x2c8] sm:$0xff]
  %v117 = vld [vmem:[%s0 + $0x2d0] sm:$0xff]
  %v118 = vld [vmem:[%s0 + $0x2d8] sm:$0xff]
  %v119 = vld [vmem:[%s0 + $0x2e0] sm:$0xff]
  %v120 = vld [vmem:[%s0 + $0x2e8] sm:$0xff]
  %v121 = vld [vmem:[%s0 + $0x2f0] sm:$0xff]
  %v122 = vld [vmem:[%s0 + $0x2f8] sm:$0xff]
  %v123 = vld [vmem:[%s0 + $0x300] sm:$0xff]
  %v124 = vld [vmem:[%s0 + $0x308] sm:$0xff]
  %v125 = vld [vmem:[%s0 + $0x310] sm:$0xff]
  %v126 = vld [vmem:[%s0 + $0x318] sm:$0xff]
  %v127 = vld [vmem:[%s0 + $0x320] sm:$0xff]
  %v128 = vld [vmem:[%s0 + $0x328] sm:$0xff]
  %v129 = vld [vmem:[%s0 + $0x330] sm:$0xff]
  %v130 = vld [vmem:[%s0 + $0x338] sm:$0xff]
  %v131 = vld [vmem:[%s0 + $0x340] sm:$0xff]
  %v132 = vld [vmem:[%s0 + $0x348] sm:$0xff]
  %v133 = vld [vmem:[%s0 + $0x350] sm:$0xff]
  %v134 = vld [vmem:[%s0 + $0x358] sm:$0xff]
  %v135 = vld [vmem:[%s0 + $0x360] sm:$0xff]
  %v136 = vld [vmem:[%s0 + $0x368] sm:$0xff]
  %v137 = vld [vmem:[%s0 + $0x370] sm:$0xff]
  %v138 = vld [vmem:[%s0 + $0x378] sm:$0xff]
  %v139 = vld [vmem:[%s0 + $0x380] sm:$0xff]
  %v140 = vld [vmem:[%s0 + $0x388] sm:$0xff]
  %v141 = vld [vmem:[%s0 + $0x390] sm:$0xff]
  %v142 = vld [vmem:[%s0 + $0x398] sm:$0xff]
  %v143 = vld [vmem:[%s0 + $0x3a0] sm:$0xff]
  %v144 = vld [vmem:[%s0 + $0x3a8] sm:$0xff]
  %v145 = vld [vmem:[%s0 + $0x3b0] sm:$0xff]
  %v146 = vld [vmem:[%s0 + $0x3b8] sm:$0xff]
  %v147 = vld [vmem:[%s0 + $0x3c0] sm:$0xff]
  %v148 = vld [vmem:[%s0 + $0x3c8] sm:$0xff]
  %v149 = vld [vmem:[%s0 + $0x3d0] sm:$0xff]
  %v150 = vld [vmem:[%s0 + $0x3d8] sm:$0xff]
  %v151 = vld [vmem:[%s0 + $0x3e0] sm:$0xff]
  %v152 = vld [vmem:[%s0 + $0x3e8] sm:$0xff]
  %v153 = vld [vmem:[%s0 + $0x3f0] sm:$0xff]
  %v154 = vld [vmem:[%s0 + $0x3f8] sm:$0xff]
  %v155 = vpack.c.bf16 %v28, %v27
  %v156 = vpack.c.bf16 %v30, %v29
  %v157 = vpack.c.bf16 %v32, %v31
  %v158 = vpack.c.bf16 %v34, %v33
  %v159 = vpack.c.bf16 %v36, %v35
  %v160 = vpack.c.bf16 %v38, %v37
  %v161 = vpack.c.bf16 %v40, %v39
  %v162 = vpack.c.bf16 %v42, %v41
  %v163 = vpack.c.bf16 %v44, %v43
  %v164 = vpack.c.bf16 %v46, %v45
  %v165 = vpack.c.bf16 %v48, %v47
  %v166 = vpack.c.bf16 %v50, %v49
  %v167 = vpack.c.bf16 %v52, %v51
  %v168 = vpack.c.bf16 %v54, %v53
  %v169 = vpack.c.bf16 %v56, %v55
  %v170 = vpack.c.bf16 %v58, %v57
  %v171 = vpack.c.bf16 %v60, %v59
  %v172 = vpack.c.bf16 %v62, %v61
  %v173 = vpack.c.bf16 %v64, %v63
  %v174 = vpack.c.bf16 %v66, %v65
  %v175 = vpack.c.bf16 %v68, %v67
  %v176 = vpack.c.bf16 %v70, %v69
  %v177 = vpack.c.bf16 %v72, %v71
  %v178 = vpack.c.bf16 %v74, %v73
  %v179 = vpack.c.bf16 %v76, %v75
  %v180 = vpack.c.bf16 %v78, %v77
  %v181 = vpack.c.bf16 %v80, %v79
  %v182 = vpack.c.bf16 %v82, %v81
  %v183 = vpack.c.bf16 %v84, %v83
  %v184 = vpack.c.bf16 %v86, %v85
  %v185 = vpack.c.bf16 %v88, %v87
  %v186 = vpack.c.bf16 %v90, %v89
  %v187 = vpack.c.bf16 %v92, %v91
  %v188 = vpack.c.bf16 %v94, %v93
  %v189 = vpack.c.bf16 %v96, %v95
  %v190 = vpack.c.bf16 %v98, %v97
  %v191 = vpack.c.bf16 %v100, %v99
  %v192 = vpack.c.bf16 %v102, %v101
  %v193 = vpack.c.bf16 %v104, %v103
  %v194 = vpack.c.bf16 %v106, %v105
  %v195 = vpack.c.bf16 %v108, %v107
  %v196 = vpack.c.bf16 %v110, %v109
  %v197 = vpack.c.bf16 %v112, %v111
  %v198 = vpack.c.bf16 %v114, %v113
  %v199 = vpack.c.bf16 %v116, %v115
  %v200 = vpack.c.bf16 %v118, %v117
  %v201 = vpack.c.bf16 %v120, %v119
  %v202 = vpack.c.bf16 %v122, %v121
  %v203 = vpack.c.bf16 %v124, %v123
  %v204 = vpack.c.bf16 %v126, %v125
  %v205 = vpack.c.bf16 %v128, %v127
  %v206 = vpack.c.bf16 %v130, %v129
  %v207 = vpack.c.bf16 %v132, %v131
  %v208 = vpack.c.bf16 %v134, %v133
  %v209 = vpack.c.bf16 %v136, %v135
  %v210 = vpack.c.bf16 %v138, %v137
  %v211 = vpack.c.bf16 %v140, %v139
  %v212 = vpack.c.bf16 %v142, %v141
  %v213 = vpack.c.bf16 %v144, %v143
  %v214 = vpack.c.bf16 %v146, %v145
  %v215 = vpack.c.bf16 %v148, %v147
  %v216 = vpack.c.bf16 %v150, %v149
  %v217 = vpack.c.bf16 %v152, %v151
  %v218 = vpack.c.bf16 %v154, %v153
  %v219 = vld [vmem:[%s1] sm:$0xf]
  %v220 = vld [vmem:[%s1 + $0x4] sm:$0xf]
  %v221 = vld [vmem:[%s2] sm:$0x1]
  %v223 = vlaneseq
  %v224 = vshrl.u32 %v223, 7
  %v225 = vsub.s32 0, %v224
  %v226 = vrot.slane %v221, %v225
  %v230 = vunpack.c.l.b16 %v219
  %v231 = vunpack.c.l.b16 %v220
  %v232 = vpack.c.b16 %v231, %v230
  %vm234 = vcmask 130048
  %v236 = vsel %vm234, %v155, 0
  %v239 = vsel %vm234, %v156, 0
  %v242 = vsel %vm234, %v157, 0
  %v245 = vsel %vm234, %v158, 0
  %v248 = vsel %vm234, %v159, 0
  %v251 = vsel %vm234, %v160, 0
  %v254 = vsel %vm234, %v161, 0
  %v257 = vsel %vm234, %v162, 0
  %v260 = vsel %vm234, %v163, 0
  %v263 = vsel %vm234, %v164, 0
  %v266 = vsel %vm234, %v165, 0
  %v269 = vsel %vm234, %v166, 0
  %v272 = vsel %vm234, %v167, 0
  %v275 = vsel %vm234, %v168, 0
  %v278 = vsel %vm234, %v169, 0
  %v281 = vsel %vm234, %v170, 0
  %v284 = vsel %vm234, %v171, 0
  %v287 = vsel %vm234, %v172, 0
  %v290 = vsel %vm234, %v173, 0
  %v293 = vsel %vm234, %v174, 0
  %v296 = vsel %vm234, %v175, 0
  %v299 = vsel %vm234, %v176, 0
  %v302 = vsel %vm234, %v177, 0
  %v305 = vsel %vm234, %v178, 0
  %v308 = vsel %vm234, %v179, 0
  %v311 = vsel %vm234, %v180, 0
  %v314 = vsel %vm234, %v181, 0
  %v317 = vsel %vm234, %v182, 0
  %v320 = vsel %vm234, %v183, 0
  %v323 = vsel %vm234, %v184, 0
  %v326 = vsel %vm234, %v185, 0
  %v329 = vsel %vm234, %v186, 0
  %v332 = vsel %vm234, %v187, 0
  %v335 = vsel %vm234, %v188, 0
  %v338 = vsel %vm234, %v189, 0
  %v341 = vsel %vm234, %v190, 0
  %v344 = vsel %vm234, %v191, 0
  %v347 = vsel %vm234, %v192, 0
  %v350 = vsel %vm234, %v193, 0
  %v353 = vsel %vm234, %v194, 0
  %v356 = vsel %vm234, %v195, 0
  %v359 = vsel %vm234, %v196, 0
  %v362 = vsel %vm234, %v197, 0
  %v365 = vsel %vm234, %v198, 0
  %v368 = vsel %vm234, %v199, 0
  %v371 = vsel %vm234, %v200, 0
  %v374 = vsel %vm234, %v201, 0
  %v377 = vsel %vm234, %v202, 0
  %v380 = vsel %vm234, %v203, 0
  %v383 = vsel %vm234, %v204, 0
  %v386 = vsel %vm234, %v205, 0
  %v389 = vsel %vm234, %v206, 0
  %v392 = vsel %vm234, %v207, 0
  %v395 = vsel %vm234, %v208, 0
  %v398 = vsel %vm234, %v209, 0
  %v401 = vsel %vm234, %v210, 0
  %v404 = vsel %vm234, %v211, 0
  %v407 = vsel %vm234, %v212, 0
  %v410 = vsel %vm234, %v213, 0
  %v413 = vsel %vm234, %v214, 0
  %v416 = vsel %vm234, %v215, 0
  %v419 = vsel %vm234, %v216, 0
  %v422 = vsel %vm234, %v217, 0
  %v425 = vsel %vm234, %v218, 0
  %427 = vmatprep.subr.bf16.mxu0 0
  %428 = vmatpush1.bf16.msra.mxu0 %v232
  %429 = vmatprep.subr.bf16.mxu0 0
  %430 = vmatpush1.bf16.msra.mxu0 0
  %431 = vmatprep.subr.bf16.mxu0 0
  %432 = vmatpush1.bf16.msra.mxu0 0
  %433 = vmatprep.subr.bf16.mxu0 0
  %434 = vmatpush1.bf16.msra.mxu0 0
  %435 = vmatprep.subr.bf16.mxu0 0
  %436 = vmatpush1.bf16.msra.mxu0 0
  %437 = vmatprep.subr.bf16.mxu0 0
  %438 = vmatpush1.bf16.msra.mxu0 0
  %439 = vmatprep.subr.bf16.mxu0 0
  %440 = vmatpush1.bf16.msra.mxu0 0
  %441 = vmatprep.subr.bf16.mxu0 0
  %442 = vmatpush1.bf16.msra.mxu0 0
  %443 = vmatprep.subr.bf16.mxu0 0
  %444 = vmatpush1.bf16.msra.mxu0 0
  %445 = vmatprep.subr.bf16.mxu0 0
  %446 = vmatpush1.bf16.msra.mxu0 0
  %447 = vmatprep.subr.bf16.mxu0 0
  %448 = vmatpush1.bf16.msra.mxu0 0
  %449 = vmatprep.subr.bf16.mxu0 0
  %450 = vmatpush1.bf16.msra.mxu0 0
  %451 = vmatprep.subr.bf16.mxu0 0
  %452 = vmatpush1.bf16.msra.mxu0 0
  %453 = vmatprep.subr.bf16.mxu0 0
  %454 = vmatpush1.bf16.msra.mxu0 0
  %455 = vmatprep.subr.bf16.mxu0 0
  %456 = vmatpush1.bf16.msra.mxu0 0
  %457 = vmatprep.subr.bf16.mxu0 0
  %458 = vmatpush1.bf16.msra.mxu0 0
  %459 = vmatprep.mubr.bf16.mxu0 0
  %460 = vmatmul.mubr.bf16.gmra.mrb[0].mxu0 %v236
  %v461 = vpop.f32.mrb[0].mxu0
  %v462 = vadd.f32 %v226, %v461
  %v463 = vpop.f32.mrb[0].mxu0
  %v464 = vpop.f32.mrb[0].mxu0
  %v465 = vadd.f32 %v226, %v464
  %v466 = vpop.f32.mrb[0].mxu0
  %467 = vmatprep.mubr.bf16.mxu0 0
  %468 = vmatmul.mubr.bf16.gmra.mrb[0].mxu0 %v239
  %v469 = vpop.f32.mrb[0].mxu0
  %v470 = vadd.f32 %v226, %v469
  %v471 = vpop.f32.mrb[0].mxu0
  %v472 = vpop.f32.mrb[0].mxu0
  %v473 = vadd.f32 %v226, %v472
  %v474 = vpop.f32.mrb[0].mxu0
  %475 = vmatprep.mubr.bf16.mxu0 0
  %476 = vmatmul.mubr.bf16.gmra.mrb[0].mxu0 %v242
  %v477 = vpop.f32.mrb[0].mxu0
  %v478 = vadd.f32 %v226, %v477
  %v479 = vpop.f32.mrb[0].mxu0
  %v480 = vpop.f32.mrb[0].mxu0
  %v481 = vadd.f32 %v226, %v480
  %v482 = vpop.f32.mrb[0].mxu0
  %483 = vmatprep.mubr.bf16.mxu0 0
  %484 = vmatmul.mubr.bf16.gmra.mrb[0].mxu0 %v245
  %v485 = vpop.f32.mrb[0].mxu0
  %v486 = vadd.f32 %v226, %v485
  %v487 = vpop.f32.mrb[0].mxu0
  %v488 = vpop.f32.mrb[0].mxu0
  %v489 = vadd.f32 %v226, %v488
  %v490 = vpop.f32.mrb[0].mxu0
  %491 = vmatprep.mubr.bf16.mxu0 0
  %492 = vmatmul.mubr.bf16.gmra.mrb[0].mxu0 %v248
  %v493 = vpop.f32.mrb[0].mxu0
  %v494 = vadd.f32 %v226, %v493
  %v495 = vpop.f32.mrb[0].mxu0
  %v496 = vpop.f32.mrb[0].mxu0
  %v497 = vadd.f32 %v226, %v496
  %v498 = vpop.f32.mrb[0].mxu0
  %499 = vmatprep.mubr.bf16.mxu0 0
  %500 = vmatmul.mubr.bf16.gmra.mrb[0].mxu0 %v251
  %v501 = vpop.f32.mrb[0].mxu0
  %v502 = vadd.f32 %v226, %v501
  %v503 = vpop.f32.mrb[0].mxu0
  %v504 = vpop.f32.mrb[0].mxu0
  %v505 = vadd.f32 %v226, %v504
  %v506 = vpop.f32.mrb[0].mxu0
  %507 = vmatprep.mubr.bf16.mxu0 0
  %508 = vmatmul.mubr.bf16.gmra.mrb[0].mxu0 %v254
  %v509 = vpop.f32.mrb[0].mxu0
  %v510 = vadd.f32 %v226, %v509
  %v511 = vpop.f32.mrb[0].mxu0
  %v512 = vpop.f32.mrb[0].mxu0
  %v513 = vadd.f32 %v226, %v512
  %v514 = vpop.f32.mrb[0].mxu0
  %515 = vmatprep.mubr.bf16.mxu0 0
  %516 = vmatmul.mubr.bf16.gmra.mrb[0].mxu0 %v257
  %v517 = vpop.f32.mrb[0].mxu0
  %v518 = vadd.f32 %v226, %v517
  %v519 = vpop.f32.mrb[0].mxu0
  %v520 = vpop.f32.mrb[0].mxu0
  %v521 = vadd.f32 %v226, %v520
  %v522 = vpop.f32.mrb[0].mxu0
  %523 = vmatprep.mubr.bf16.mxu0 0
  %524 = vmatmul.mubr.bf16.gmra.mrb[0].mxu0 %v260
  %v525 = vpop.f32.mrb[0].mxu0
  %v526 = vadd.f32 %v226, %v525
  %v527 = vpop.f32.mrb[0].mxu0
  %v528 = vpop.f32.mrb[0].mxu0
  %v529 = vadd.f32 %v226, %v528
  %v530 = vpop.f32.mrb[0].mxu0
  %531 = vmatprep.mubr.bf16.mxu0 0
  %532 = vmatmul.mubr.bf16.gmra.mrb[0].mxu0 %v263
  %v533 = vpop.f32.mrb[0].mxu0
  %v534 = vadd.f32 %v226, %v533
  %v535 = vpop.f32.mrb[0].mxu0
  %v536 = vpop.f32.mrb[0].mxu0
  %v537 = vadd.f32 %v226, %v536
  %v538 = vpop.f32.mrb[0].mxu0
  %539 = vmatprep.mubr.bf16.mxu0 0
  %540 = vmatmul.mubr.bf16.gmra.mrb[0].mxu0 %v266
  %v541 = vpop.f32.mrb[0].mxu0
  %v542 = vadd.f32 %v226, %v541
  %v543 = vpop.f32.mrb[0].mxu0
  %v544 = vpop.f32.mrb[0].mxu0
  %v545 = vadd.f32 %v226, %v544
  %v546 = vpop.f32.mrb[0].mxu0
  %547 = vmatprep.mubr.bf16.mxu0 0
  %548 = vmatmul.mubr.bf16.gmra.mrb[0].mxu0 %v269
  %v549 = vpop.f32.mrb[0].mxu0
  %v550 = vadd.f32 %v226, %v549
  %v551 = vpop.f32.mrb[0].mxu0
  %v552 = vpop.f32.mrb[0].mxu0
  %v553 = vadd.f32 %v226, %v552
  %v554 = vpop.f32.mrb[0].mxu0
  %555 = vmatprep.mubr.bf16.mxu0 0
  %556 = vmatmul.mubr.bf16.gmra.mrb[0].mxu0 %v272
  %v557 = vpop.f32.mrb[0].mxu0
  %v558 = vadd.f32 %v226, %v557
  %v559 = vpop.f32.mrb[0].mxu0
  %v560 = vpop.f32.mrb[0].mxu0
  %v561 = vadd.f32 %v226, %v560
  %v562 = vpop.f32.mrb[0].mxu0
  %563 = vmatprep.mubr.bf16.mxu0 0
  %564 = vmatmul.mubr.bf16.gmra.mrb[0].mxu0 %v275
  %v565 = vpop.f32.mrb[0].mxu0
  %v566 = vadd.f32 %v226, %v565
  %v567 = vpop.f32.mrb[0].mxu0
  %v568 = vpop.f32.mrb[0].mxu0
  %v569 = vadd.f32 %v226, %v568
  %v570 = vpop.f32.mrb[0].mxu0
  %571 = vmatprep.mubr.bf16.mxu0 0
  %572 = vmatmul.mubr.bf16.gmra.mrb[0].mxu0 %v278
  %v573 = vpop.f32.mrb[0].mxu0
  %v574 = vadd.f32 %v226, %v573
  %v575 = vpop.f32.mrb[0].mxu0
  %v576 = vpop.f32.mrb[0].mxu0
  %v577 = vadd.f32 %v226, %v576
  %v578 = vpop.f32.mrb[0].mxu0
  %579 = vmatprep.mubr.bf16.mxu0 0
  %580 = vmatmul.mubr.bf16.gmra.mrb[0].mxu0 %v281
  %v581 = vpop.f32.mrb[0].mxu0
  %v582 = vadd.f32 %v226, %v581
  %v583 = vpop.f32.mrb[0].mxu0
  %v584 = vpop.f32.mrb[0].mxu0
  %v585 = vadd.f32 %v226, %v584
  %v586 = vpop.f32.mrb[0].mxu0
  %587 = vmatprep.mubr.bf16.mxu0 0
  %588 = vmatmul.mubr.bf16.gmra.mrb[0].mxu0 %v284
  %v589 = vpop.f32.mrb[0].mxu0
  %v590 = vadd.f32 %v226, %v589
  %v591 = vpop.f32.mrb[0].mxu0
  %v592 = vpop.f32.mrb[0].mxu0
  %v593 = vadd.f32 %v226, %v592
  %v594 = vpop.f32.mrb[0].mxu0
  %595 = vmatprep.mubr.bf16.mxu0 0
  %596 = vmatmul.mubr.bf16.gmra.mrb[0].mxu0 %v287
  %v597 = vpop.f32.mrb[0].mxu0
  %v598 = vadd.f32 %v226, %v597
  %v599 = vpop.f32.mrb[0].mxu0
  %v600 = vpop.f32.mrb[0].mxu0
  %v601 = vadd.f32 %v226, %v600
  %v602 = vpop.f32.mrb[0].mxu0
  %603 = vmatprep.mubr.bf16.mxu0 0
  %604 = vmatmul.mubr.bf16.gmra.mrb[0].mxu0 %v290
  %v605 = vpop.f32.mrb[0].mxu0
  %v606 = vadd.f32 %v226, %v605
  %v607 = vpop.f32.mrb[0].mxu0
  %v608 = vpop.f32.mrb[0].mxu0
  %v609 = vadd.f32 %v226, %v608
  %v610 = vpop.f32.mrb[0].mxu0
  %611 = vmatprep.mubr.bf16.mxu0 0
  %612 = vmatmul.mubr.bf16.gmra.mrb[0].mxu0 %v293
  %v613 = vpop.f32.mrb[0].mxu0
  %v614 = vadd.f32 %v226, %v613
  %v615 = vpop.f32.mrb[0].mxu0
  %v616 = vpop.f32.mrb[0].mxu0
  %v617 = vadd.f32 %v226, %v616
  %v618 = vpop.f32.mrb[0].mxu0
  %619 = vmatprep.mubr.bf16.mxu0 0
  %620 = vmatmul.mubr.bf16.gmra.mrb[0].mxu0 %v296
  %v621 = vpop.f32.mrb[0].mxu0
  %v622 = vadd.f32 %v226, %v621
  %v623 = vpop.f32.mrb[0].mxu0
  %v624 = vpop.f32.mrb[0].mxu0
  %v625 = vadd.f32 %v226, %v624
  %v626 = vpop.f32.mrb[0].mxu0
  %627 = vmatprep.mubr.bf16.mxu0 0
  %628 = vmatmul.mubr.bf16.gmra.mrb[0].mxu0 %v299
  %v629 = vpop.f32.mrb[0].mxu0
  %v630 = vadd.f32 %v226, %v629
  %v631 = vpop.f32.mrb[0].mxu0
  %v632 = vpop.f32.mrb[0].mxu0
  %v633 = vadd.f32 %v226, %v632
  %v634 = vpop.f32.mrb[0].mxu0
  %635 = vmatprep.mubr.bf16.mxu0 0
  %636 = vmatmul.mubr.bf16.gmra.mrb[0].mxu0 %v302
  %v637 = vpop.f32.mrb[0].mxu0
  %v638 = vadd.f32 %v226, %v637
  %v639 = vpop.f32.mrb[0].mxu0
  %v640 = vpop.f32.mrb[0].mxu0
  %v641 = vadd.f32 %v226, %v640
  %v642 = vpop.f32.mrb[0].mxu0
  %643 = vmatprep.mubr.bf16.mxu0 0
  %644 = vmatmul.mubr.bf16.gmra.mrb[0].mxu0 %v305
  %v645 = vpop.f32.mrb[0].mxu0
  %v646 = vadd.f32 %v226, %v645
  %v647 = vpop.f32.mrb[0].mxu0
  %v648 = vpop.f32.mrb[0].mxu0
  %v649 = vadd.f32 %v226, %v648
  %v650 = vpop.f32.mrb[0].mxu0
  %651 = vmatprep.mubr.bf16.mxu0 0
  %652 = vmatmul.mubr.bf16.gmra.mrb[0].mxu0 %v308
  %v653 = vpop.f32.mrb[0].mxu0
  %v654 = vadd.f32 %v226, %v653
  %v655 = vpop.f32.mrb[0].mxu0
  %v656 = vpop.f32.mrb[0].mxu0
  %v657 = vadd.f32 %v226, %v656
  %v658 = vpop.f32.mrb[0].mxu0
  %659 = vmatprep.mubr.bf16.mxu0 0
  %660 = vmatmul.mubr.bf16.gmra.mrb[0].mxu0 %v311
  %v661 = vpop.f32.mrb[0].mxu0
  %v662 = vadd.f32 %v226, %v661
  %v663 = vpop.f32.mrb[0].mxu0
  %v664 = vpop.f32.mrb[0].mxu0
  %v665 = vadd.f32 %v226, %v664
  %v666 = vpop.f32.mrb[0].mxu0
  %667 = vmatprep.mubr.bf16.mxu0 0
  %668 = vmatmul.mubr.bf16.gmra.mrb[0].mxu0 %v314
  %v669 = vpop.f32.mrb[0].mxu0
  %v670 = vadd.f32 %v226, %v669
  %v671 = vpop.f32.mrb[0].mxu0
  %v672 = vpop.f32.mrb[0].mxu0
  %v673 = vadd.f32 %v226, %v672
  %v674 = vpop.f32.mrb[0].mxu0
  %675 = vmatprep.mubr.bf16.mxu0 0
  %676 = vmatmul.mubr.bf16.gmra.mrb[0].mxu0 %v317
  %v677 = vpop.f32.mrb[0].mxu0
  %v678 = vadd.f32 %v226, %v677
  %v679 = vpop.f32.mrb[0].mxu0
  %v680 = vpop.f32.mrb[0].mxu0
  %v681 = vadd.f32 %v226, %v680
  %v682 = vpop.f32.mrb[0].mxu0
  %683 = vmatprep.mubr.bf16.mxu0 0
  %684 = vmatmul.mubr.bf16.gmra.mrb[0].mxu0 %v320
  %v685 = vpop.f32.mrb[0].mxu0
  %v686 = vadd.f32 %v226, %v685
  %v687 = vpop.f32.mrb[0].mxu0
  %v688 = vpop.f32.mrb[0].mxu0
  %v689 = vadd.f32 %v226, %v688
  %v690 = vpop.f32.mrb[0].mxu0
  %691 = vmatprep.mubr.bf16.mxu0 0
  %692 = vmatmul.mubr.bf16.gmra.mrb[0].mxu0 %v323
  %v693 = vpop.f32.mrb[0].mxu0
  %v694 = vadd.f32 %v226, %v693
  %v695 = vpop.f32.mrb[0].mxu0
  %v696 = vpop.f32.mrb[0].mxu0
  %v697 = vadd.f32 %v226, %v696
  %v698 = vpop.f32.mrb[0].mxu0
  %699 = vmatprep.mubr.bf16.mxu0 0
  %700 = vmatmul.mubr.bf16.gmra.mrb[0].mxu0 %v326
  %v701 = vpop.f32.mrb[0].mxu0
  %v702 = vadd.f32 %v226, %v701
  %v703 = vpop.f32.mrb[0].mxu0
  %v704 = vpop.f32.mrb[0].mxu0
  %v705 = vadd.f32 %v226, %v704
  %v706 = vpop.f32.mrb[0].mxu0
  %707 = vmatprep.mubr.bf16.mxu0 0
  %708 = vmatmul.mubr.bf16.gmra.mrb[0].mxu0 %v329
  %v709 = vpop.f32.mrb[0].mxu0
  %v710 = vadd.f32 %v226, %v709
  %v711 = vpop.f32.mrb[0].mxu0
  %v712 = vpop.f32.mrb[0].mxu0
  %v713 = vadd.f32 %v226, %v712
  %v714 = vpop.f32.mrb[0].mxu0
  %715 = vmatprep.mubr.bf16.mxu0 0
  %716 = vmatmul.mubr.bf16.gmra.mrb[0].mxu0 %v332
  %v717 = vpop.f32.mrb[0].mxu0
  %v718 = vadd.f32 %v226, %v717
  %v719 = vpop.f32.mrb[0].mxu0
  %v720 = vpop.f32.mrb[0].mxu0
  %v721 = vadd.f32 %v226, %v720
  %v722 = vpop.f32.mrb[0].mxu0
  %723 = vmatprep.mubr.bf16.mxu0 0
  %724 = vmatmul.mubr.bf16.gmra.mrb[0].mxu0 %v335
  %v725 = vpop.f32.mrb[0].mxu0
  %v726 = vadd.f32 %v226, %v725
  %v727 = vpop.f32.mrb[0].mxu0
  %v728 = vpop.f32.mrb[0].mxu0
  %v729 = vadd.f32 %v226, %v728
  %v730 = vpop.f32.mrb[0].mxu0
  %731 = vmatprep.mubr.bf16.mxu0 0
  %732 = vmatmul.mubr.bf16.gmra.mrb[0].mxu0 %v338
  %v733 = vpop.f32.mrb[0].mxu0
  %v734 = vadd.f32 %v226, %v733
  %v735 = vpop.f32.mrb[0].mxu0
  %v736 = vpop.f32.mrb[0].mxu0
  %v737 = vadd.f32 %v226, %v736
  %v738 = vpop.f32.mrb[0].mxu0
  %739 = vmatprep.mubr.bf16.mxu0 0
  %740 = vmatmul.mubr.bf16.gmra.mrb[0].mxu0 %v341
  %v741 = vpop.f32.mrb[0].mxu0
  %v742 = vadd.f32 %v226, %v741
  %v743 = vpop.f32.mrb[0].mxu0
  %v744 = vpop.f32.mrb[0].mxu0
  %v745 = vadd.f32 %v226, %v744
  %v746 = vpop.f32.mrb[0].mxu0
  %747 = vmatprep.mubr.bf16.mxu0 0
  %748 = vmatmul.mubr.bf16.gmra.mrb[0].mxu0 %v344
  %v749 = vpop.f32.mrb[0].mxu0
  %v750 = vadd.f32 %v226, %v749
  %v751 = vpop.f32.mrb[0].mxu0
  %v752 = vpop.f32.mrb[0].mxu0
  %v753 = vadd.f32 %v226, %v752
  %v754 = vpop.f32.mrb[0].mxu0
  %755 = vmatprep.mubr.bf16.mxu0 0
  %756 = vmatmul.mubr.bf16.gmra.mrb[0].mxu0 %v347
  %v757 = vpop.f32.mrb[0].mxu0
  %v758 = vadd.f32 %v226, %v757
  %v759 = vpop.f32.mrb[0].mxu0
  %v760 = vpop.f32.mrb[0].mxu0
  %v761 = vadd.f32 %v226, %v760
  %v762 = vpop.f32.mrb[0].mxu0
  %763 = vmatprep.mubr.bf16.mxu0 0
  %764 = vmatmul.mubr.bf16.gmra.mrb[0].mxu0 %v350
  %v765 = vpop.f32.mrb[0].mxu0
  %v766 = vadd.f32 %v226, %v765
  %v767 = vpop.f32.mrb[0].mxu0
  %v768 = vpop.f32.mrb[0].mxu0
  %v769 = vadd.f32 %v226, %v768
  %v770 = vpop.f32.mrb[0].mxu0
  %771 = vmatprep.mubr.bf16.mxu0 0
  %772 = vmatmul.mubr.bf16.gmra.mrb[0].mxu0 %v353
  %v773 = vpop.f32.mrb[0].mxu0
  %v774 = vadd.f32 %v226, %v773
  %v775 = vpop.f32.mrb[0].mxu0
  %v776 = vpop.f32.mrb[0].mxu0
  %v777 = vadd.f32 %v226, %v776
  %v778 = vpop.f32.mrb[0].mxu0
  %779 = vmatprep.mubr.bf16.mxu0 0
  %780 = vmatmul.mubr.bf16.gmra.mrb[0].mxu0 %v356
  %v781 = vpop.f32.mrb[0].mxu0
  %v782 = vadd.f32 %v226, %v781
  %v783 = vpop.f32.mrb[0].mxu0
  %v784 = vpop.f32.mrb[0].mxu0
  %v785 = vadd.f32 %v226, %v784
  %v786 = vpop.f32.mrb[0].mxu0
  %787 = vmatprep.mubr.bf16.mxu0 0
  %788 = vmatmul.mubr.bf16.gmra.mrb[0].mxu0 %v359
  %v789 = vpop.f32.mrb[0].mxu0
  %v790 = vadd.f32 %v226, %v789
  %v791 = vpop.f32.mrb[0].mxu0
  %v792 = vpop.f32.mrb[0].mxu0
  %v793 = vadd.f32 %v226, %v792
  %v794 = vpop.f32.mrb[0].mxu0
  %795 = vmatprep.mubr.bf16.mxu0 0
  %796 = vmatmul.mubr.bf16.gmra.mrb[0].mxu0 %v362
  %v797 = vpop.f32.mrb[0].mxu0
  %v798 = vadd.f32 %v226, %v797
  %v799 = vpop.f32.mrb[0].mxu0
  %v800 = vpop.f32.mrb[0].mxu0
  %v801 = vadd.f32 %v226, %v800
  %v802 = vpop.f32.mrb[0].mxu0
  %803 = vmatprep.mubr.bf16.mxu0 0
  %804 = vmatmul.mubr.bf16.gmra.mrb[0].mxu0 %v365
  %v805 = vpop.f32.mrb[0].mxu0
  %v806 = vadd.f32 %v226, %v805
  %v807 = vpop.f32.mrb[0].mxu0
  %v808 = vpop.f32.mrb[0].mxu0
  %v809 = vadd.f32 %v226, %v808
  %v810 = vpop.f32.mrb[0].mxu0
  %811 = vmatprep.mubr.bf16.mxu0 0
  %812 = vmatmul.mubr.bf16.gmra.mrb[0].mxu0 %v368
  %v813 = vpop.f32.mrb[0].mxu0
  %v814 = vadd.f32 %v226, %v813
  %v815 = vpop.f32.mrb[0].mxu0
  %v816 = vpop.f32.mrb[0].mxu0
  %v817 = vadd.f32 %v226, %v816
  %v818 = vpop.f32.mrb[0].mxu0
  %819 = vmatprep.mubr.bf16.mxu0 0
  %820 = vmatmul.mubr.bf16.gmra.mrb[0].mxu0 %v371
  %v821 = vpop.f32.mrb[0].mxu0
  %v822 = vadd.f32 %v226, %v821
  %v823 = vpop.f32.mrb[0].mxu0
  %v824 = vpop.f32.mrb[0].mxu0
  %v825 = vadd.f32 %v226, %v824
  %v826 = vpop.f32.mrb[0].mxu0
  %827 = vmatprep.mubr.bf16.mxu0 0
  %828 = vmatmul.mubr.bf16.gmra.mrb[0].mxu0 %v374
  %v829 = vpop.f32.mrb[0].mxu0
  %v830 = vadd.f32 %v226, %v829
  %v831 = vpop.f32.mrb[0].mxu0
  %v832 = vpop.f32.mrb[0].mxu0
  %v833 = vadd.f32 %v226, %v832
  %v834 = vpop.f32.mrb[0].mxu0
  %835 = vmatprep.mubr.bf16.mxu0 0
  %836 = vmatmul.mubr.bf16.gmra.mrb[0].mxu0 %v377
  %v837 = vpop.f32.mrb[0].mxu0
  %v838 = vadd.f32 %v226, %v837
  %v839 = vpop.f32.mrb[0].mxu0
  %v840 = vpop.f32.mrb[0].mxu0
  %v841 = vadd.f32 %v226, %v840
  %v842 = vpop.f32.mrb[0].mxu0
  %843 = vmatprep.mubr.bf16.mxu0 0
  %844 = vmatmul.mubr.bf16.gmra.mrb[0].mxu0 %v380
  %v845 = vpop.f32.mrb[0].mxu0
  %v846 = vadd.f32 %v226, %v845
  %v847 = vpop.f32.mrb[0].mxu0
  %v848 = vpop.f32.mrb[0].mxu0
  %v849 = vadd.f32 %v226, %v848
  %v850 = vpop.f32.mrb[0].mxu0
  %851 = vmatprep.mubr.bf16.mxu0 0
  %852 = vmatmul.mubr.bf16.gmra.mrb[0].mxu0 %v383
  %v853 = vpop.f32.mrb[0].mxu0
  %v854 = vadd.f32 %v226, %v853
  %v855 = vpop.f32.mrb[0].mxu0
  %v856 = vpop.f32.mrb[0].mxu0
  %v857 = vadd.f32 %v226, %v856
  %v858 = vpop.f32.mrb[0].mxu0
  %859 = vmatprep.mubr.bf16.mxu0 0
  %860 = vmatmul.mubr.bf16.gmra.mrb[0].mxu0 %v386
  %v861 = vpop.f32.mrb[0].mxu0
  %v862 = vadd.f32 %v226, %v861
  %v863 = vpop.f32.mrb[0].mxu0
  %v864 = vpop.f32.mrb[0].mxu0
  %v865 = vadd.f32 %v226, %v864
  %v866 = vpop.f32.mrb[0].mxu0
  %867 = vmatprep.mubr.bf16.mxu0 0
  %868 = vmatmul.mubr.bf16.gmra.mrb[0].mxu0 %v389
  %v869 = vpop.f32.mrb[0].mxu0
  %v870 = vadd.f32 %v226, %v869
  %v871 = vpop.f32.mrb[0].mxu0
  %v872 = vpop.f32.mrb[0].mxu0
  %v873 = vadd.f32 %v226, %v872
  %v874 = vpop.f32.mrb[0].mxu0
  %875 = vmatprep.mubr.bf16.mxu0 0
  %876 = vmatmul.mubr.bf16.gmra.mrb[0].mxu0 %v392
  %v877 = vpop.f32.mrb[0].mxu0
  %v878 = vadd.f32 %v226, %v877
  %v879 = vpop.f32.mrb[0].mxu0
  %v880 = vpop.f32.mrb[0].mxu0
  %v881 = vadd.f32 %v226, %v880
  %v882 = vpop.f32.mrb[0].mxu0
  %883 = vmatprep.mubr.bf16.mxu0 0
  %884 = vmatmul.mubr.bf16.gmra.mrb[0].mxu0 %v395
  %v885 = vpop.f32.mrb[0].mxu0
  %v886 = vadd.f32 %v226, %v885
  %v887 = vpop.f32.mrb[0].mxu0
  %v888 = vpop.f32.mrb[0].mxu0
  %v889 = vadd.f32 %v226, %v888
  %v890 = vpop.f32.mrb[0].mxu0
  %891 = vmatprep.mubr.bf16.mxu0 0
  %892 = vmatmul.mubr.bf16.gmra.mrb[0].mxu0 %v398
  %v893 = vpop.f32.mrb[0].mxu0
  %v894 = vadd.f32 %v226, %v893
  %v895 = vpop.f32.mrb[0].mxu0
  %v896 = vpop.f32.mrb[0].mxu0
  %v897 = vadd.f32 %v226, %v896
  %v898 = vpop.f32.mrb[0].mxu0
  %899 = vmatprep.mubr.bf16.mxu0 0
  %900 = vmatmul.mubr.bf16.gmra.mrb[0].mxu0 %v401
  %v901 = vpop.f32.mrb[0].mxu0
  %v902 = vadd.f32 %v226, %v901
  %v903 = vpop.f32.mrb[0].mxu0
  %v904 = vpop.f32.mrb[0].mxu0
  %v905 = vadd.f32 %v226, %v904
  %v906 = vpop.f32.mrb[0].mxu0
  %907 = vmatprep.mubr.bf16.mxu0 0
  %908 = vmatmul.mubr.bf16.gmra.mrb[0].mxu0 %v404
  %v909 = vpop.f32.mrb[0].mxu0
  %v910 = vadd.f32 %v226, %v909
  %v911 = vpop.f32.mrb[0].mxu0
  %v912 = vpop.f32.mrb[0].mxu0
  %v913 = vadd.f32 %v226, %v912
  %v914 = vpop.f32.mrb[0].mxu0
  %915 = vmatprep.mubr.bf16.mxu0 0
  %916 = vmatmul.mubr.bf16.gmra.mrb[0].mxu0 %v407
  %v917 = vpop.f32.mrb[0].mxu0
  %v918 = vadd.f32 %v226, %v917
  %v919 = vpop.f32.mrb[0].mxu0
  %v920 = vpop.f32.mrb[0].mxu0
  %v921 = vadd.f32 %v226, %v920
  %v922 = vpop.f32.mrb[0].mxu0
  %923 = vmatprep.mubr.bf16.mxu0 0
  %924 = vmatmul.mubr.bf16.gmra.mrb[0].mxu0 %v410
  %v925 = vpop.f32.mrb[0].mxu0
  %v926 = vadd.f32 %v226, %v925
  %v927 = vpop.f32.mrb[0].mxu0
  %v928 = vpop.f32.mrb[0].mxu0
  %v929 = vadd.f32 %v226, %v928
  %v930 = vpop.f32.mrb[0].mxu0
  %931 = vmatprep.mubr.bf16.mxu0 0
  %932 = vmatmul.mubr.bf16.gmra.mrb[0].mxu0 %v413
  %v933 = vpop.f32.mrb[0].mxu0
  %v934 = vadd.f32 %v226, %v933
  %v935 = vpop.f32.mrb[0].mxu0
  %v936 = vpop.f32.mrb[0].mxu0
  %v937 = vadd.f32 %v226, %v936
  %v938 = vpop.f32.mrb[0].mxu0
  %939 = vmatprep.mubr.bf16.mxu0 0
  %940 = vmatmul.mubr.bf16.gmra.mrb[0].mxu0 %v416
  %v941 = vpop.f32.mrb[0].mxu0
  %v942 = vadd.f32 %v226, %v941
  %v943 = vpop.f32.mrb[0].mxu0
  %v944 = vpop.f32.mrb[0].mxu0
  %v945 = vadd.f32 %v226, %v944
  %v946 = vpop.f32.mrb[0].mxu0
  %947 = vmatprep.mubr.bf16.mxu0 0
  %948 = vmatmul.mubr.bf16.gmra.mrb[0].mxu0 %v419
  %v949 = vpop.f32.mrb[0].mxu0
  %v950 = vadd.f32 %v226, %v949
  %v951 = vpop.f32.mrb[0].mxu0
  %v952 = vpop.f32.mrb[0].mxu0
  %v953 = vadd.f32 %v226, %v952
  %v954 = vpop.f32.mrb[0].mxu0
  %955 = vmatprep.mubr.bf16.mxu0 0
  %956 = vmatmul.mubr.bf16.gmra.mrb[0].mxu0 %v422
  %v957 = vpop.f32.mrb[0].mxu0
  %v958 = vadd.f32 %v226, %v957
  %v959 = vpop.f32.mrb[0].mxu0
  %v960 = vpop.f32.mrb[0].mxu0
  %v961 = vadd.f32 %v226, %v960
  %v962 = vpop.f32.mrb[0].mxu0
  %963 = vmatprep.mubr.bf16.mxu0 0
  %964 = vmatmul.mubr.bf16.gmra.mrb[0].mxu0 %v425
  %v965 = vpop.f32.mrb[0].mxu0
  %v966 = vadd.f32 %v226, %v965
  %v967 = vpop.f32.mrb[0].mxu0
  %v968 = vpop.f32.mrb[0].mxu0
  %v969 = vadd.f32 %v226, %v968
  %v970 = vpop.f32.mrb[0].mxu0
  %971 = vdwg.mxu0
  %v972 = vtanh.pop %v462
  %v973 = vtanh.pop %v465
  %v974 = vtanh.pop %v470
  %v975 = vtanh.pop %v473
  %v976 = vtanh.pop %v478
  %v977 = vtanh.pop %v481
  %v978 = vtanh.pop %v486
  %v979 = vtanh.pop %v489
  %v980 = vtanh.pop %v494
  %v981 = vtanh.pop %v497
  %v982 = vtanh.pop %v502
  %v983 = vtanh.pop %v505
  %v984 = vtanh.pop %v510
  %v985 = vtanh.pop %v513
  %v986 = vtanh.pop %v518
  %v987 = vtanh.pop %v521
  %v988 = vtanh.pop %v526
  %v989 = vtanh.pop %v529
  %v990 = vtanh.pop %v534
  %v991 = vtanh.pop %v537
  %v992 = vtanh.pop %v542
  %v993 = vtanh.pop %v545
  %v994 = vtanh.pop %v550
  %v995 = vtanh.pop %v553
  %v996 = vtanh.pop %v558
  %v997 = vtanh.pop %v561
  %v998 = vtanh.pop %v566
  %v999 = vtanh.pop %v569
  %v1000 = vtanh.pop %v574
  %v1001 = vtanh.pop %v577
  %v1002 = vtanh.pop %v582
  %v1003 = vtanh.pop %v585
  %v1004 = vtanh.pop %v590
  %v1005 = vtanh.pop %v593
  %v1006 = vtanh.pop %v598
  %v1007 = vtanh.pop %v601
  %v1008 = vtanh.pop %v606
  %v1009 = vtanh.pop %v609
  %v1010 = vtanh.pop %v614
  %v1011 = vtanh.pop %v617
  %v1012 = vtanh.pop %v622
  %v1013 = vtanh.pop %v625
  %v1014 = vtanh.pop %v630
  %v1015 = vtanh.pop %v633
  %v1016 = vtanh.pop %v638
  %v1017 = vtanh.pop %v641
  %v1018 = vtanh.pop %v646
  %v1019 = vtanh.pop %v649
  %v1020 = vtanh.pop %v654
  %v1021 = vtanh.pop %v657
  %v1022 = vtanh.pop %v662
  %v1023 = vtanh.pop %v665
  %v1024 = vtanh.pop %v670
  %v1025 = vtanh.pop %v673
  %v1026 = vtanh.pop %v678
  %v1027 = vtanh.pop %v681
  %v1028 = vtanh.pop %v686
  %v1029 = vtanh.pop %v689
  %v1030 = vtanh.pop %v694
  %v1031 = vtanh.pop %v697
  %v1032 = vtanh.pop %v702
  %v1033 = vtanh.pop %v705
  %v1034 = vtanh.pop %v710
  %v1035 = vtanh.pop %v713
  %v1036 = vtanh.pop %v718
  %v1037 = vtanh.pop %v721
  %v1038 = vtanh.pop %v726
  %v1039 = vtanh.pop %v729
  %v1040 = vtanh.pop %v734
  %v1041 = vtanh.pop %v737
  %v1042 = vtanh.pop %v742
  %v1043 = vtanh.pop %v745
  %v1044 = vtanh.pop %v750
  %v1045 = vtanh.pop %v753
  %v1046 = vtanh.pop %v758
  %v1047 = vtanh.pop %v761
  %v1048 = vtanh.pop %v766
  %v1049 = vtanh.pop %v769
  %v1050 = vtanh.pop %v774
  %v1051 = vtanh.pop %v777
  %v1052 = vtanh.pop %v782
  %v1053 = vtanh.pop %v785
  %v1054 = vtanh.pop %v790
  %v1055 = vtanh.pop %v793
  %v1056 = vtanh.pop %v798
  %v1057 = vtanh.pop %v801
  %v1058 = vtanh.pop %v806
  %v1059 = vtanh.pop %v809
  %v1060 = vtanh.pop %v814
  %v1061 = vtanh.pop %v817
  %v1062 = vtanh.pop %v822
  %v1063 = vtanh.pop %v825
  %v1064 = vtanh.pop %v830
  %v1065 = vtanh.pop %v833
  %v1066 = vtanh.pop %v838
  %v1067 = vtanh.pop %v841
  %v1068 = vtanh.pop %v846
  %v1069 = vtanh.pop %v849
  %v1070 = vtanh.pop %v854
  %v1071 = vtanh.pop %v857
  %v1072 = vtanh.pop %v862
  %v1073 = vtanh.pop %v865
  %v1074 = vtanh.pop %v870
  %v1075 = vtanh.pop %v873
  %v1076 = vtanh.pop %v878
  %v1077 = vtanh.pop %v881
  %v1078 = vtanh.pop %v886
  %v1079 = vtanh.pop %v889
  %v1080 = vtanh.pop %v894
  %v1081 = vtanh.pop %v897
  %v1082 = vtanh.pop %v902
  %v1083 = vtanh.pop %v905
  %v1084 = vtanh.pop %v910
  %v1085 = vtanh.pop %v913
  %v1086 = vtanh.pop %v918
  %v1087 = vtanh.pop %v921
  %v1088 = vtanh.pop %v926
  %v1089 = vtanh.pop %v929
  %v1090 = vtanh.pop %v934
  %v1091 = vtanh.pop %v937
  %v1092 = vtanh.pop %v942
  %v1093 = vtanh.pop %v945
  %v1094 = vtanh.pop %v950
  %v1095 = vtanh.pop %v953
  %v1096 = vtanh.pop %v958
  %v1097 = vtanh.pop %v961
  %v1098 = vtanh.pop %v966
  %v1099 = vtanh.pop %v969
  %v1100 = vpack.c.bf16 %v973, %v972
  %v1101 = vpack.c.bf16 %v975, %v974
  %v1102 = vpack.c.bf16 %v977, %v976
  %v1103 = vpack.c.bf16 %v979, %v978
  %v1104 = vpack.c.bf16 %v981, %v980
  %v1105 = vpack.c.bf16 %v983, %v982
  %v1106 = vpack.c.bf16 %v985, %v984
  %v1107 = vpack.c.bf16 %v987, %v986
  %v1108 = vpack.c.bf16 %v989, %v988
  %v1109 = vpack.c.bf16 %v991, %v990
  %v1110 = vpack.c.bf16 %v993, %v992
  %v1111 = vpack.c.bf16 %v995, %v994
  %v1112 = vpack.c.bf16 %v997, %v996
  %v1113 = vpack.c.bf16 %v999, %v998
  %v1114 = vpack.c.bf16 %v1001, %v1000
  %v1115 = vpack.c.bf16 %v1003, %v1002
  %v1116 = vpack.c.bf16 %v1005, %v1004
  %v1117 = vpack.c.bf16 %v1007, %v1006
  %v1118 = vpack.c.bf16 %v1009, %v1008
  %v1119 = vpack.c.bf16 %v1011, %v1010
  %v1120 = vpack.c.bf16 %v1013, %v1012
  %v1121 = vpack.c.bf16 %v1015, %v1014
  %v1122 = vpack.c.bf16 %v1017, %v1016
  %v1123 = vpack.c.bf16 %v1019, %v1018
  %v1124 = vpack.c.bf16 %v1021, %v1020
  %v1125 = vpack.c.bf16 %v1023, %v1022
  %v1126 = vpack.c.bf16 %v1025, %v1024
  %v1127 = vpack.c.bf16 %v1027, %v1026
  %v1128 = vpack.c.bf16 %v1029, %v1028
  %v1129 = vpack.c.bf16 %v1031, %v1030
  %v1130 = vpack.c.bf16 %v1033, %v1032
  %v1131 = vpack.c.bf16 %v1035, %v1034
  %v1132 = vpack.c.bf16 %v1037, %v1036
  %v1133 = vpack.c.bf16 %v1039, %v1038
  %v1134 = vpack.c.bf16 %v1041, %v1040
  %v1135 = vpack.c.bf16 %v1043, %v1042
  %v1136 = vpack.c.bf16 %v1045, %v1044
  %v1137 = vpack.c.bf16 %v1047, %v1046
  %v1138 = vpack.c.bf16 %v1049, %v1048
  %v1139 = vpack.c.bf16 %v1051, %v1050
  %v1140 = vpack.c.bf16 %v1053, %v1052
  %v1141 = vpack.c.bf16 %v1055, %v1054
  %v1142 = vpack.c.bf16 %v1057, %v1056
  %v1143 = vpack.c.bf16 %v1059, %v1058
  %v1144 = vpack.c.bf16 %v1061, %v1060
  %v1145 = vpack.c.bf16 %v1063, %v1062
  %v1146 = vpack.c.bf16 %v1065, %v1064
  %v1147 = vpack.c.bf16 %v1067, %v1066
  %v1148 = vpack.c.bf16 %v1069, %v1068
  %v1149 = vpack.c.bf16 %v1071, %v1070
  %v1150 = vpack.c.bf16 %v1073, %v1072
  %v1151 = vpack.c.bf16 %v1075, %v1074
  %v1152 = vpack.c.bf16 %v1077, %v1076
  %v1153 = vpack.c.bf16 %v1079, %v1078
  %v1154 = vpack.c.bf16 %v1081, %v1080
  %v1155 = vpack.c.bf16 %v1083, %v1082
  %v1156 = vpack.c.bf16 %v1085, %v1084
  %v1157 = vpack.c.bf16 %v1087, %v1086
  %v1158 = vpack.c.bf16 %v1089, %v1088
  %v1159 = vpack.c.bf16 %v1091, %v1090
  %v1160 = vpack.c.bf16 %v1093, %v1092
  %v1161 = vpack.c.bf16 %v1095, %v1094
  %v1162 = vpack.c.bf16 %v1097, %v1096
  %v1163 = vpack.c.bf16 %v1099, %v1098
  %v1164 = vld [vmem:[%s3] sm:$0xf]
  %v1165 = vld [vmem:[%s3 + $0x4] sm:$0xf]
  %v1166 = vld [vmem:[%s3 + $0x8] sm:$0xf]
  %v1167 = vld [vmem:[%s3 + $0xc] sm:$0xf]
  %v1168 = vld [vmem:[%s4] sm:$0x1]
  %v1170 = vlaneseq
  %v1171 = vshrl.u32 %v1170, 7
  %v1172 = vsub.s32 0, %v1171
  %v1173 = vrot.slane %v1168, %v1172
  %v1179 = vunpack.c.l.b16 %v1164
  %v1180 = vunpack.c.l.b16 %v1165
  %v1181 = vunpack.c.l.b16 %v1166
  %v1182 = vunpack.c.l.b16 %v1167
  %v1183 = vpack.c.b16 %v1180, %v1179
  %v1184 = vpack.c.b16 %v1182, %v1181
  %vm1187 = vcmask 261120
  %v1189 = vsel %vm1187, %v1100, 0
  %v1192 = vsel %vm1187, %v1101, 0
  %v1195 = vsel %vm1187, %v1102, 0
  %v1198 = vsel %vm1187, %v1103, 0
  %v1201 = vsel %vm1187, %v1104, 0
  %v1204 = vsel %vm1187, %v1105, 0
  %v1207 = vsel %vm1187, %v1106, 0
  %v1210 = vsel %vm1187, %v1107, 0
  %v1213 = vsel %vm1187, %v1108, 0
  %v1216 = vsel %vm1187, %v1109, 0
  %v1219 = vsel %vm1187, %v1110, 0
  %v1222 = vsel %vm1187, %v1111, 0
  %v1225 = vsel %vm1187, %v1112, 0
  %v1228 = vsel %vm1187, %v1113, 0
  %v1231 = vsel %vm1187, %v1114, 0
  %v1234 = vsel %vm1187, %v1115, 0
  %v1237 = vsel %vm1187, %v1116, 0
  %v1240 = vsel %vm1187, %v1117, 0
  %v1243 = vsel %vm1187, %v1118, 0
  %v1246 = vsel %vm1187, %v1119, 0
  %v1249 = vsel %vm1187, %v1120, 0
  %v1252 = vsel %vm1187, %v1121, 0
  %v1255 = vsel %vm1187, %v1122, 0
  %v1258 = vsel %vm1187, %v1123, 0
  %v1261 = vsel %vm1187, %v1124, 0
  %v1264 = vsel %vm1187, %v1125, 0
  %v1267 = vsel %vm1187, %v1126, 0
  %v1270 = vsel %vm1187, %v1127, 0
  %v1273 = vsel %vm1187, %v1128, 0
  %v1276 = vsel %vm1187, %v1129, 0
  %v1279 = vsel %vm1187, %v1130, 0
  %v1282 = vsel %vm1187, %v1131, 0
  %v1285 = vsel %vm1187, %v1132, 0
  %v1288 = vsel %vm1187, %v1133, 0
  %v1291 = vsel %vm1187, %v1134, 0
  %v1294 = vsel %vm1187, %v1135, 0
  %v1297 = vsel %vm1187, %v1136, 0
  %v1300 = vsel %vm1187, %v1137, 0
  %v1303 = vsel %vm1187, %v1138, 0
  %v1306 = vsel %vm1187, %v1139, 0
  %v1309 = vsel %vm1187, %v1140, 0
  %v1312 = vsel %vm1187, %v1141, 0
  %v1315 = vsel %vm1187, %v1142, 0
  %v1318 = vsel %vm1187, %v1143, 0
  %v1321 = vsel %vm1187, %v1144, 0
  %v1324 = vsel %vm1187, %v1145, 0
  %v1327 = vsel %vm1187, %v1146, 0
  %v1330 = vsel %vm1187, %v1147, 0
  %v1333 = vsel %vm1187, %v1148, 0
  %v1336 = vsel %vm1187, %v1149, 0
  %v1339 = vsel %vm1187, %v1150, 0
  %v1342 = vsel %vm1187, %v1151, 0
  %v1345 = vsel %vm1187, %v1152, 0
  %v1348 = vsel %vm1187, %v1153, 0
  %v1351 = vsel %vm1187, %v1154, 0
  %v1354 = vsel %vm1187, %v1155, 0
  %v1357 = vsel %vm1187, %v1156, 0
  %v1360 = vsel %vm1187, %v1157, 0
  %v1363 = vsel %vm1187, %v1158, 0
  %v1366 = vsel %vm1187, %v1159, 0
  %v1369 = vsel %vm1187, %v1160, 0
  %v1372 = vsel %vm1187, %v1161, 0
  %v1375 = vsel %vm1187, %v1162, 0
  %v1378 = vsel %vm1187, %v1163, 0
  %1380 = vmatprep.subr.bf16.mxu0 0
  %1381 = vmatpush1.bf16.msra.mxu0 %v1183
  %1382 = vmatprep.subr.bf16.mxu0 0
  %1383 = vmatpush1.bf16.msra.mxu0 %v1184
  %1384 = vmatprep.subr.bf16.mxu0 0
  %1385 = vmatpush1.bf16.msra.mxu0 0
  %1386 = vmatprep.subr.bf16.mxu0 0
  %1387 = vmatpush1.bf16.msra.mxu0 0
  %1388 = vmatprep.subr.bf16.mxu0 0
  %1389 = vmatpush1.bf16.msra.mxu0 0
  %1390 = vmatprep.subr.bf16.mxu0 0
  %1391 = vmatpush1.bf16.msra.mxu0 0
  %1392 = vmatprep.subr.bf16.mxu0 0
  %1393 = vmatpush1.bf16.msra.mxu0 0
  %1394 = vmatprep.subr.bf16.mxu0 0
  %1395 = vmatpush1.bf16.msra.mxu0 0
  %1396 = vmatprep.subr.bf16.mxu0 0
  %1397 = vmatpush1.bf16.msra.mxu0 0
  %1398 = vmatprep.subr.bf16.mxu0 0
  %1399 = vmatpush1.bf16.msra.mxu0 0
  %1400 = vmatprep.subr.bf16.mxu0 0
  %1401 = vmatpush1.bf16.msra.mxu0 0
  %1402 = vmatprep.subr.bf16.mxu0 0
  %1403 = vmatpush1.bf16.msra.mxu0 0
  %1404 = vmatprep.subr.bf16.mxu0 0
  %1405 = vmatpush1.bf16.msra.mxu0 0
  %1406 = vmatprep.subr.bf16.mxu0 0
  %1407 = vmatpush1.bf16.msra.mxu0 0
  %1408 = vmatprep.subr.bf16.mxu0 0
  %1409 = vmatpush1.bf16.msra.mxu0 0
  %1410 = vmatprep.subr.bf16.mxu0 0
  %1411 = vmatpush1.bf16.msra.mxu0 0
  %1412 = vmatprep.mubr.bf16.mxu0 0
  %1413 = vmatmul.mubr.bf16.gmra.mrb[0].mxu0 %v1189
  %v1414 = vpop.f32.mrb[0].mxu0
  %v1415 = vadd.f32 %v1173, %v1414
  %v1416 = vpop.f32.mrb[0].mxu0
  %v1417 = vpop.f32.mrb[0].mxu0
  %v1418 = vadd.f32 %v1173, %v1417
  %v1419 = vpop.f32.mrb[0].mxu0
  %1420 = vmatprep.mubr.bf16.mxu0 0
  %1421 = vmatmul.mubr.bf16.gmra.mrb[0].mxu0 %v1192
  %v1422 = vpop.f32.mrb[0].mxu0
  %v1423 = vadd.f32 %v1173, %v1422
  %v1424 = vpop.f32.mrb[0].mxu0
  %v1425 = vpop.f32.mrb[0].mxu0
  %v1426 = vadd.f32 %v1173, %v1425
  %v1427 = vpop.f32.mrb[0].mxu0
  %1428 = vmatprep.mubr.bf16.mxu0 0
  %1429 = vmatmul.mubr.bf16.gmra.mrb[0].mxu0 %v1195
  %v1430 = vpop.f32.mrb[0].mxu0
  %v1431 = vadd.f32 %v1173, %v1430
  %v1432 = vpop.f32.mrb[0].mxu0
  %v1433 = vpop.f32.mrb[0].mxu0
  %v1434 = vadd.f32 %v1173, %v1433
  %v1435 = vpop.f32.mrb[0].mxu0
  %1436 = vmatprep.mubr.bf16.mxu0 0
  %1437 = vmatmul.mubr.bf16.gmra.mrb[0].mxu0 %v1198
  %v1438 = vpop.f32.mrb[0].mxu0
  %v1439 = vadd.f32 %v1173, %v1438
  %v1440 = vpop.f32.mrb[0].mxu0
  %v1441 = vpop.f32.mrb[0].mxu0
  %v1442 = vadd.f32 %v1173, %v1441
  %v1443 = vpop.f32.mrb[0].mxu0
  %1444 = vmatprep.mubr.bf16.mxu0 0
  %1445 = vmatmul.mubr.bf16.gmra.mrb[0].mxu0 %v1201
  %v1446 = vpop.f32.mrb[0].mxu0
  %v1447 = vadd.f32 %v1173, %v1446
  %v1448 = vpop.f32.mrb[0].mxu0
  %v1449 = vpop.f32.mrb[0].mxu0
  %v1450 = vadd.f32 %v1173, %v1449
  %v1451 = vpop.f32.mrb[0].mxu0
  %1452 = vmatprep.mubr.bf16.mxu0 0
  %1453 = vmatmul.mubr.bf16.gmra.mrb[0].mxu0 %v1204
  %v1454 = vpop.f32.mrb[0].mxu0
  %v1455 = vadd.f32 %v1173, %v1454
  %v1456 = vpop.f32.mrb[0].mxu0
  %v1457 = vpop.f32.mrb[0].mxu0
  %v1458 = vadd.f32 %v1173, %v1457
  %v1459 = vpop.f32.mrb[0].mxu0
  %1460 = vmatprep.mubr.bf16.mxu0 0
  %1461 = vmatmul.mubr.bf16.gmra.mrb[0].mxu0 %v1207
  %v1462 = vpop.f32.mrb[0].mxu0
  %v1463 = vadd.f32 %v1173, %v1462
  %v1464 = vpop.f32.mrb[0].mxu0
  %v1465 = vpop.f32.mrb[0].mxu0
  %v1466 = vadd.f32 %v1173, %v1465
  %v1467 = vpop.f32.mrb[0].mxu0
  %1468 = vmatprep.mubr.bf16.mxu0 0
  %1469 = vmatmul.mubr.bf16.gmra.mrb[0].mxu0 %v1210
  %v1470 = vpop.f32.mrb[0].mxu0
  %v1471 = vadd.f32 %v1173, %v1470
  %v1472 = vpop.f32.mrb[0].mxu0
  %v1473 = vpop.f32.mrb[0].mxu0
  %v1474 = vadd.f32 %v1173, %v1473
  %v1475 = vpop.f32.mrb[0].mxu0
  %1476 = vmatprep.mubr.bf16.mxu0 0
  %1477 = vmatmul.mubr.bf16.gmra.mrb[0].mxu0 %v1213
  %v1478 = vpop.f32.mrb[0].mxu0
  %v1479 = vadd.f32 %v1173, %v1478
  %v1480 = vpop.f32.mrb[0].mxu0
  %v1481 = vpop.f32.mrb[0].mxu0
  %v1482 = vadd.f32 %v1173, %v1481
  %v1483 = vpop.f32.mrb[0].mxu0
  %1484 = vmatprep.mubr.bf16.mxu0 0
  %1485 = vmatmul.mubr.bf16.gmra.mrb[0].mxu0 %v1216
  %v1486 = vpop.f32.mrb[0].mxu0
  %v1487 = vadd.f32 %v1173, %v1486
  %v1488 = vpop.f32.mrb[0].mxu0
  %v1489 = vpop.f32.mrb[0].mxu0
  %v1490 = vadd.f32 %v1173, %v1489
  %v1491 = vpop.f32.mrb[0].mxu0
  %1492 = vmatprep.mubr.bf16.mxu0 0
  %1493 = vmatmul.mubr.bf16.gmra.mrb[0].mxu0 %v1219
  %v1494 = vpop.f32.mrb[0].mxu0
  %v1495 = vadd.f32 %v1173, %v1494
  %v1496 = vpop.f32.mrb[0].mxu0
  %v1497 = vpop.f32.mrb[0].mxu0
  %v1498 = vadd.f32 %v1173, %v1497
  %v1499 = vpop.f32.mrb[0].mxu0
  %1500 = vmatprep.mubr.bf16.mxu0 0
  %1501 = vmatmul.mubr.bf16.gmra.mrb[0].mxu0 %v1222
  %v1502 = vpop.f32.mrb[0].mxu0
  %v1503 = vadd.f32 %v1173, %v1502
  %v1504 = vpop.f32.mrb[0].mxu0
  %v1505 = vpop.f32.mrb[0].mxu0
  %v1506 = vadd.f32 %v1173, %v1505
  %v1507 = vpop.f32.mrb[0].mxu0
  %1508 = vmatprep.mubr.bf16.mxu0 0
  %1509 = vmatmul.mubr.bf16.gmra.mrb[0].mxu0 %v1225
  %v1510 = vpop.f32.mrb[0].mxu0
  %v1511 = vadd.f32 %v1173, %v1510
  %v1512 = vpop.f32.mrb[0].mxu0
  %v1513 = vpop.f32.mrb[0].mxu0
  %v1514 = vadd.f32 %v1173, %v1513
  %v1515 = vpop.f32.mrb[0].mxu0
  %1516 = vmatprep.mubr.bf16.mxu0 0
  %1517 = vmatmul.mubr.bf16.gmra.mrb[0].mxu0 %v1228
  %v1518 = vpop.f32.mrb[0].mxu0
  %v1519 = vadd.f32 %v1173, %v1518
  %v1520 = vpop.f32.mrb[0].mxu0
  %v1521 = vpop.f32.mrb[0].mxu0
  %v1522 = vadd.f32 %v1173, %v1521
  %v1523 = vpop.f32.mrb[0].mxu0
  %1524 = vmatprep.mubr.bf16.mxu0 0
  %1525 = vmatmul.mubr.bf16.gmra.mrb[0].mxu0 %v1231
  %v1526 = vpop.f32.mrb[0].mxu0
  %v1527 = vadd.f32 %v1173, %v1526
  %v1528 = vpop.f32.mrb[0].mxu0
  %v1529 = vpop.f32.mrb[0].mxu0
  %v1530 = vadd.f32 %v1173, %v1529
  %v1531 = vpop.f32.mrb[0].mxu0
  %1532 = vmatprep.mubr.bf16.mxu0 0
  %1533 = vmatmul.mubr.bf16.gmra.mrb[0].mxu0 %v1234
  %v1534 = vpop.f32.mrb[0].mxu0
  %v1535 = vadd.f32 %v1173, %v1534
  %v1536 = vpop.f32.mrb[0].mxu0
  %v1537 = vpop.f32.mrb[0].mxu0
  %v1538 = vadd.f32 %v1173, %v1537
  %v1539 = vpop.f32.mrb[0].mxu0
  %1540 = vmatprep.mubr.bf16.mxu0 0
  %1541 = vmatmul.mubr.bf16.gmra.mrb[0].mxu0 %v1237
  %v1542 = vpop.f32.mrb[0].mxu0
  %v1543 = vadd.f32 %v1173, %v1542
  %v1544 = vpop.f32.mrb[0].mxu0
  %v1545 = vpop.f32.mrb[0].mxu0
  %v1546 = vadd.f32 %v1173, %v1545
  %v1547 = vpop.f32.mrb[0].mxu0
  %1548 = vmatprep.mubr.bf16.mxu0 0
  %1549 = vmatmul.mubr.bf16.gmra.mrb[0].mxu0 %v1240
  %v1550 = vpop.f32.mrb[0].mxu0
  %v1551 = vadd.f32 %v1173, %v1550
  %v1552 = vpop.f32.mrb[0].mxu0
  %v1553 = vpop.f32.mrb[0].mxu0
  %v1554 = vadd.f32 %v1173, %v1553
  %v1555 = vpop.f32.mrb[0].mxu0
  %1556 = vmatprep.mubr.bf16.mxu0 0
  %1557 = vmatmul.mubr.bf16.gmra.mrb[0].mxu0 %v1243
  %v1558 = vpop.f32.mrb[0].mxu0
  %v1559 = vadd.f32 %v1173, %v1558
  %v1560 = vpop.f32.mrb[0].mxu0
  %v1561 = vpop.f32.mrb[0].mxu0
  %v1562 = vadd.f32 %v1173, %v1561
  %v1563 = vpop.f32.mrb[0].mxu0
  %1564 = vmatprep.mubr.bf16.mxu0 0
  %1565 = vmatmul.mubr.bf16.gmra.mrb[0].mxu0 %v1246
  %v1566 = vpop.f32.mrb[0].mxu0
  %v1567 = vadd.f32 %v1173, %v1566
  %v1568 = vpop.f32.mrb[0].mxu0
  %v1569 = vpop.f32.mrb[0].mxu0
  %v1570 = vadd.f32 %v1173, %v1569
  %v1571 = vpop.f32.mrb[0].mxu0
  %1572 = vmatprep.mubr.bf16.mxu0 0
  %1573 = vmatmul.mubr.bf16.gmra.mrb[0].mxu0 %v1249
  %v1574 = vpop.f32.mrb[0].mxu0
  %v1575 = vadd.f32 %v1173, %v1574
  %v1576 = vpop.f32.mrb[0].mxu0
  %v1577 = vpop.f32.mrb[0].mxu0
  %v1578 = vadd.f32 %v1173, %v1577
  %v1579 = vpop.f32.mrb[0].mxu0
  %1580 = vmatprep.mubr.bf16.mxu0 0
  %1581 = vmatmul.mubr.bf16.gmra.mrb[0].mxu0 %v1252
  %v1582 = vpop.f32.mrb[0].mxu0
  %v1583 = vadd.f32 %v1173, %v1582
  %v1584 = vpop.f32.mrb[0].mxu0
  %v1585 = vpop.f32.mrb[0].mxu0
  %v1586 = vadd.f32 %v1173, %v1585
  %v1587 = vpop.f32.mrb[0].mxu0
  %1588 = vmatprep.mubr.bf16.mxu0 0
  %1589 = vmatmul.mubr.bf16.gmra.mrb[0].mxu0 %v1255
  %v1590 = vpop.f32.mrb[0].mxu0
  %v1591 = vadd.f32 %v1173, %v1590
  %v1592 = vpop.f32.mrb[0].mxu0
  %v1593 = vpop.f32.mrb[0].mxu0
  %v1594 = vadd.f32 %v1173, %v1593
  %v1595 = vpop.f32.mrb[0].mxu0
  %1596 = vmatprep.mubr.bf16.mxu0 0
  %1597 = vmatmul.mubr.bf16.gmra.mrb[0].mxu0 %v1258
  %v1598 = vpop.f32.mrb[0].mxu0
  %v1599 = vadd.f32 %v1173, %v1598
  %v1600 = vpop.f32.mrb[0].mxu0
  %v1601 = vpop.f32.mrb[0].mxu0
  %v1602 = vadd.f32 %v1173, %v1601
  %v1603 = vpop.f32.mrb[0].mxu0
  %1604 = vmatprep.mubr.bf16.mxu0 0
  %1605 = vmatmul.mubr.bf16.gmra.mrb[0].mxu0 %v1261
  %v1606 = vpop.f32.mrb[0].mxu0
  %v1607 = vadd.f32 %v1173, %v1606
  %v1608 = vpop.f32.mrb[0].mxu0
  %v1609 = vpop.f32.mrb[0].mxu0
  %v1610 = vadd.f32 %v1173, %v1609
  %v1611 = vpop.f32.mrb[0].mxu0
  %1612 = vmatprep.mubr.bf16.mxu0 0
  %1613 = vmatmul.mubr.bf16.gmra.mrb[0].mxu0 %v1264
  %v1614 = vpop.f32.mrb[0].mxu0
  %v1615 = vadd.f32 %v1173, %v1614
  %v1616 = vpop.f32.mrb[0].mxu0
  %v1617 = vpop.f32.mrb[0].mxu0
  %v1618 = vadd.f32 %v1173, %v1617
  %v1619 = vpop.f32.mrb[0].mxu0
  %1620 = vmatprep.mubr.bf16.mxu0 0
  %1621 = vmatmul.mubr.bf16.gmra.mrb[0].mxu0 %v1267
  %v1622 = vpop.f32.mrb[0].mxu0
  %v1623 = vadd.f32 %v1173, %v1622
  %v1624 = vpop.f32.mrb[0].mxu0
  %v1625 = vpop.f32.mrb[0].mxu0
  %v1626 = vadd.f32 %v1173, %v1625
  %v1627 = vpop.f32.mrb[0].mxu0
  %1628 = vmatprep.mubr.bf16.mxu0 0
  %1629 = vmatmul.mubr.bf16.gmra.mrb[0].mxu0 %v1270
  %v1630 = vpop.f32.mrb[0].mxu0
  %v1631 = vadd.f32 %v1173, %v1630
  %v1632 = vpop.f32.mrb[0].mxu0
  %v1633 = vpop.f32.mrb[0].mxu0
  %v1634 = vadd.f32 %v1173, %v1633
  %v1635 = vpop.f32.mrb[0].mxu0
  %1636 = vmatprep.mubr.bf16.mxu0 0
  %1637 = vmatmul.mubr.bf16.gmra.mrb[0].mxu0 %v1273
  %v1638 = vpop.f32.mrb[0].mxu0
  %v1639 = vadd.f32 %v1173, %v1638
  %v1640 = vpop.f32.mrb[0].mxu0
  %v1641 = vpop.f32.mrb[0].mxu0
  %v1642 = vadd.f32 %v1173, %v1641
  %v1643 = vpop.f32.mrb[0].mxu0
  %1644 = vmatprep.mubr.bf16.mxu0 0
  %1645 = vmatmul.mubr.bf16.gmra.mrb[0].mxu0 %v1276
  %v1646 = vpop.f32.mrb[0].mxu0
  %v1647 = vadd.f32 %v1173, %v1646
  %v1648 = vpop.f32.mrb[0].mxu0
  %v1649 = vpop.f32.mrb[0].mxu0
  %v1650 = vadd.f32 %v1173, %v1649
  %v1651 = vpop.f32.mrb[0].mxu0
  %1652 = vmatprep.mubr.bf16.mxu0 0
  %1653 = vmatmul.mubr.bf16.gmra.mrb[0].mxu0 %v1279
  %v1654 = vpop.f32.mrb[0].mxu0
  %v1655 = vadd.f32 %v1173, %v1654
  %v1656 = vpop.f32.mrb[0].mxu0
  %v1657 = vpop.f32.mrb[0].mxu0
  %v1658 = vadd.f32 %v1173, %v1657
  %v1659 = vpop.f32.mrb[0].mxu0
  %1660 = vmatprep.mubr.bf16.mxu0 0
  %1661 = vmatmul.mubr.bf16.gmra.mrb[0].mxu0 %v1282
  %v1662 = vpop.f32.mrb[0].mxu0
  %v1663 = vadd.f32 %v1173, %v1662
  %v1664 = vpop.f32.mrb[0].mxu0
  %v1665 = vpop.f32.mrb[0].mxu0
  %v1666 = vadd.f32 %v1173, %v1665
  %v1667 = vpop.f32.mrb[0].mxu0
  %1668 = vmatprep.mubr.bf16.mxu0 0
  %1669 = vmatmul.mubr.bf16.gmra.mrb[0].mxu0 %v1285
  %v1670 = vpop.f32.mrb[0].mxu0
  %v1671 = vadd.f32 %v1173, %v1670
  %v1672 = vpop.f32.mrb[0].mxu0
  %v1673 = vpop.f32.mrb[0].mxu0
  %v1674 = vadd.f32 %v1173, %v1673
  %v1675 = vpop.f32.mrb[0].mxu0
  %1676 = vmatprep.mubr.bf16.mxu0 0
  %1677 = vmatmul.mubr.bf16.gmra.mrb[0].mxu0 %v1288
  %v1678 = vpop.f32.mrb[0].mxu0
  %v1679 = vadd.f32 %v1173, %v1678
  %v1680 = vpop.f32.mrb[0].mxu0
  %v1681 = vpop.f32.mrb[0].mxu0
  %v1682 = vadd.f32 %v1173, %v1681
  %v1683 = vpop.f32.mrb[0].mxu0
  %1684 = vmatprep.mubr.bf16.mxu0 0
  %1685 = vmatmul.mubr.bf16.gmra.mrb[0].mxu0 %v1291
  %v1686 = vpop.f32.mrb[0].mxu0
  %v1687 = vadd.f32 %v1173, %v1686
  %v1688 = vpop.f32.mrb[0].mxu0
  %v1689 = vpop.f32.mrb[0].mxu0
  %v1690 = vadd.f32 %v1173, %v1689
  %v1691 = vpop.f32.mrb[0].mxu0
  %1692 = vmatprep.mubr.bf16.mxu0 0
  %1693 = vmatmul.mubr.bf16.gmra.mrb[0].mxu0 %v1294
  %v1694 = vpop.f32.mrb[0].mxu0
  %v1695 = vadd.f32 %v1173, %v1694
  %v1696 = vpop.f32.mrb[0].mxu0
  %v1697 = vpop.f32.mrb[0].mxu0
  %v1698 = vadd.f32 %v1173, %v1697
  %v1699 = vpop.f32.mrb[0].mxu0
  %1700 = vmatprep.mubr.bf16.mxu0 0
  %1701 = vmatmul.mubr.bf16.gmra.mrb[0].mxu0 %v1297
  %v1702 = vpop.f32.mrb[0].mxu0
  %v1703 = vadd.f32 %v1173, %v1702
  %v1704 = vpop.f32.mrb[0].mxu0
  %v1705 = vpop.f32.mrb[0].mxu0
  %v1706 = vadd.f32 %v1173, %v1705
  %v1707 = vpop.f32.mrb[0].mxu0
  %1708 = vmatprep.mubr.bf16.mxu0 0
  %1709 = vmatmul.mubr.bf16.gmra.mrb[0].mxu0 %v1300
  %v1710 = vpop.f32.mrb[0].mxu0
  %v1711 = vadd.f32 %v1173, %v1710
  %v1712 = vpop.f32.mrb[0].mxu0
  %v1713 = vpop.f32.mrb[0].mxu0
  %v1714 = vadd.f32 %v1173, %v1713
  %v1715 = vpop.f32.mrb[0].mxu0
  %1716 = vmatprep.mubr.bf16.mxu0 0
  %1717 = vmatmul.mubr.bf16.gmra.mrb[0].mxu0 %v1303
  %v1718 = vpop.f32.mrb[0].mxu0
  %v1719 = vadd.f32 %v1173, %v1718
  %v1720 = vpop.f32.mrb[0].mxu0
  %v1721 = vpop.f32.mrb[0].mxu0
  %v1722 = vadd.f32 %v1173, %v1721
  %v1723 = vpop.f32.mrb[0].mxu0
  %1724 = vmatprep.mubr.bf16.mxu0 0
  %1725 = vmatmul.mubr.bf16.gmra.mrb[0].mxu0 %v1306
  %v1726 = vpop.f32.mrb[0].mxu0
  %v1727 = vadd.f32 %v1173, %v1726
  %v1728 = vpop.f32.mrb[0].mxu0
  %v1729 = vpop.f32.mrb[0].mxu0
  %v1730 = vadd.f32 %v1173, %v1729
  %v1731 = vpop.f32.mrb[0].mxu0
  %1732 = vmatprep.mubr.bf16.mxu0 0
  %1733 = vmatmul.mubr.bf16.gmra.mrb[0].mxu0 %v1309
  %v1734 = vpop.f32.mrb[0].mxu0
  %v1735 = vadd.f32 %v1173, %v1734
  %v1736 = vpop.f32.mrb[0].mxu0
  %v1737 = vpop.f32.mrb[0].mxu0
  %v1738 = vadd.f32 %v1173, %v1737
  %v1739 = vpop.f32.mrb[0].mxu0
  %1740 = vmatprep.mubr.bf16.mxu0 0
  %1741 = vmatmul.mubr.bf16.gmra.mrb[0].mxu0 %v1312
  %v1742 = vpop.f32.mrb[0].mxu0
  %v1743 = vadd.f32 %v1173, %v1742
  %v1744 = vpop.f32.mrb[0].mxu0
  %v1745 = vpop.f32.mrb[0].mxu0
  %v1746 = vadd.f32 %v1173, %v1745
  %v1747 = vpop.f32.mrb[0].mxu0
  %1748 = vmatprep.mubr.bf16.mxu0 0
  %1749 = vmatmul.mubr.bf16.gmra.mrb[0].mxu0 %v1315
  %v1750 = vpop.f32.mrb[0].mxu0
  %v1751 = vadd.f32 %v1173, %v1750
  %v1752 = vpop.f32.mrb[0].mxu0
  %v1753 = vpop.f32.mrb[0].mxu0
  %v1754 = vadd.f32 %v1173, %v1753
  %v1755 = vpop.f32.mrb[0].mxu0
  %1756 = vmatprep.mubr.bf16.mxu0 0
  %1757 = vmatmul.mubr.bf16.gmra.mrb[0].mxu0 %v1318
  %v1758 = vpop.f32.mrb[0].mxu0
  %v1759 = vadd.f32 %v1173, %v1758
  %v1760 = vpop.f32.mrb[0].mxu0
  %v1761 = vpop.f32.mrb[0].mxu0
  %v1762 = vadd.f32 %v1173, %v1761
  %v1763 = vpop.f32.mrb[0].mxu0
  %1764 = vmatprep.mubr.bf16.mxu0 0
  %1765 = vmatmul.mubr.bf16.gmra.mrb[0].mxu0 %v1321
  %v1766 = vpop.f32.mrb[0].mxu0
  %v1767 = vadd.f32 %v1173, %v1766
  %v1768 = vpop.f32.mrb[0].mxu0
  %v1769 = vpop.f32.mrb[0].mxu0
  %v1770 = vadd.f32 %v1173, %v1769
  %v1771 = vpop.f32.mrb[0].mxu0
  %1772 = vmatprep.mubr.bf16.mxu0 0
  %1773 = vmatmul.mubr.bf16.gmra.mrb[0].mxu0 %v1324
  %v1774 = vpop.f32.mrb[0].mxu0
  %v1775 = vadd.f32 %v1173, %v1774
  %v1776 = vpop.f32.mrb[0].mxu0
  %v1777 = vpop.f32.mrb[0].mxu0
  %v1778 = vadd.f32 %v1173, %v1777
  %v1779 = vpop.f32.mrb[0].mxu0
  %1780 = vmatprep.mubr.bf16.mxu0 0
  %1781 = vmatmul.mubr.bf16.gmra.mrb[0].mxu0 %v1327
  %v1782 = vpop.f32.mrb[0].mxu0
  %v1783 = vadd.f32 %v1173, %v1782
  %v1784 = vpop.f32.mrb[0].mxu0
  %v1785 = vpop.f32.mrb[0].mxu0
  %v1786 = vadd.f32 %v1173, %v1785
  %v1787 = vpop.f32.mrb[0].mxu0
  %1788 = vmatprep.mubr.bf16.mxu0 0
  %1789 = vmatmul.mubr.bf16.gmra.mrb[0].mxu0 %v1330
  %v1790 = vpop.f32.mrb[0].mxu0
  %v1791 = vadd.f32 %v1173, %v1790
  %v1792 = vpop.f32.mrb[0].mxu0
  %v1793 = vpop.f32.mrb[0].mxu0
  %v1794 = vadd.f32 %v1173, %v1793
  %v1795 = vpop.f32.mrb[0].mxu0
  %1796 = vmatprep.mubr.bf16.mxu0 0
  %1797 = vmatmul.mubr.bf16.gmra.mrb[0].mxu0 %v1333
  %v1798 = vpop.f32.mrb[0].mxu0
  %v1799 = vadd.f32 %v1173, %v1798
  %v1800 = vpop.f32.mrb[0].mxu0
  %v1801 = vpop.f32.mrb[0].mxu0
  %v1802 = vadd.f32 %v1173, %v1801
  %v1803 = vpop.f32.mrb[0].mxu0
  %1804 = vmatprep.mubr.bf16.mxu0 0
  %1805 = vmatmul.mubr.bf16.gmra.mrb[0].mxu0 %v1336
  %v1806 = vpop.f32.mrb[0].mxu0
  %v1807 = vadd.f32 %v1173, %v1806
  %v1808 = vpop.f32.mrb[0].mxu0
  %v1809 = vpop.f32.mrb[0].mxu0
  %v1810 = vadd.f32 %v1173, %v1809
  %v1811 = vpop.f32.mrb[0].mxu0
  %1812 = vmatprep.mubr.bf16.mxu0 0
  %1813 = vmatmul.mubr.bf16.gmra.mrb[0].mxu0 %v1339
  %v1814 = vpop.f32.mrb[0].mxu0
  %v1815 = vadd.f32 %v1173, %v1814
  %v1816 = vpop.f32.mrb[0].mxu0
  %v1817 = vpop.f32.mrb[0].mxu0
  %v1818 = vadd.f32 %v1173, %v1817
  %v1819 = vpop.f32.mrb[0].mxu0
  %1820 = vmatprep.mubr.bf16.mxu0 0
  %1821 = vmatmul.mubr.bf16.gmra.mrb[0].mxu0 %v1342
  %v1822 = vpop.f32.mrb[0].mxu0
  %v1823 = vadd.f32 %v1173, %v1822
  %v1824 = vpop.f32.mrb[0].mxu0
  %v1825 = vpop.f32.mrb[0].mxu0
  %v1826 = vadd.f32 %v1173, %v1825
  %v1827 = vpop.f32.mrb[0].mxu0
  %1828 = vmatprep.mubr.bf16.mxu0 0
  %1829 = vmatmul.mubr.bf16.gmra.mrb[0].mxu0 %v1345
  %v1830 = vpop.f32.mrb[0].mxu0
  %v1831 = vadd.f32 %v1173, %v1830
  %v1832 = vpop.f32.mrb[0].mxu0
  %v1833 = vpop.f32.mrb[0].mxu0
  %v1834 = vadd.f32 %v1173, %v1833
  %v1835 = vpop.f32.mrb[0].mxu0
  %1836 = vmatprep.mubr.bf16.mxu0 0
  %1837 = vmatmul.mubr.bf16.gmra.mrb[0].mxu0 %v1348
  %v1838 = vpop.f32.mrb[0].mxu0
  %v1839 = vadd.f32 %v1173, %v1838
  %v1840 = vpop.f32.mrb[0].mxu0
  %v1841 = vpop.f32.mrb[0].mxu0
  %v1842 = vadd.f32 %v1173, %v1841
  %v1843 = vpop.f32.mrb[0].mxu0
  %1844 = vmatprep.mubr.bf16.mxu0 0
  %1845 = vmatmul.mubr.bf16.gmra.mrb[0].mxu0 %v1351
  %v1846 = vpop.f32.mrb[0].mxu0
  %v1847 = vadd.f32 %v1173, %v1846
  %v1848 = vpop.f32.mrb[0].mxu0
  %v1849 = vpop.f32.mrb[0].mxu0
  %v1850 = vadd.f32 %v1173, %v1849
  %v1851 = vpop.f32.mrb[0].mxu0
  %1852 = vmatprep.mubr.bf16.mxu0 0
  %1853 = vmatmul.mubr.bf16.gmra.mrb[0].mxu0 %v1354
  %v1854 = vpop.f32.mrb[0].mxu0
  %v1855 = vadd.f32 %v1173, %v1854
  %v1856 = vpop.f32.mrb[0].mxu0
  %v1857 = vpop.f32.mrb[0].mxu0
  %v1858 = vadd.f32 %v1173, %v1857
  %v1859 = vpop.f32.mrb[0].mxu0
  %1860 = vmatprep.mubr.bf16.mxu0 0
  %1861 = vmatmul.mubr.bf16.gmra.mrb[0].mxu0 %v1357
  %v1862 = vpop.f32.mrb[0].mxu0
  %v1863 = vadd.f32 %v1173, %v1862
  %v1864 = vpop.f32.mrb[0].mxu0
  %v1865 = vpop.f32.mrb[0].mxu0
  %v1866 = vadd.f32 %v1173, %v1865
  %v1867 = vpop.f32.mrb[0].mxu0
  %1868 = vmatprep.mubr.bf16.mxu0 0
  %1869 = vmatmul.mubr.bf16.gmra.mrb[0].mxu0 %v1360
  %v1870 = vpop.f32.mrb[0].mxu0
  %v1871 = vadd.f32 %v1173, %v1870
  %v1872 = vpop.f32.mrb[0].mxu0
  %v1873 = vpop.f32.mrb[0].mxu0
  %v1874 = vadd.f32 %v1173, %v1873
  %v1875 = vpop.f32.mrb[0].mxu0
  %1876 = vmatprep.mubr.bf16.mxu0 0
  %1877 = vmatmul.mubr.bf16.gmra.mrb[0].mxu0 %v1363
  %v1878 = vpop.f32.mrb[0].mxu0
  %v1879 = vadd.f32 %v1173, %v1878
  %v1880 = vpop.f32.mrb[0].mxu0
  %v1881 = vpop.f32.mrb[0].mxu0
  %v1882 = vadd.f32 %v1173, %v1881
  %v1883 = vpop.f32.mrb[0].mxu0
  %1884 = vmatprep.mubr.bf16.mxu0 0
  %1885 = vmatmul.mubr.bf16.gmra.mrb[0].mxu0 %v1366
  %v1886 = vpop.f32.mrb[0].mxu0
  %v1887 = vadd.f32 %v1173, %v1886
  %v1888 = vpop.f32.mrb[0].mxu0
  %v1889 = vpop.f32.mrb[0].mxu0
  %v1890 = vadd.f32 %v1173, %v1889
  %v1891 = vpop.f32.mrb[0].mxu0
  %1892 = vmatprep.mubr.bf16.mxu0 0
  %1893 = vmatmul.mubr.bf16.gmra.mrb[0].mxu0 %v1369
  %v1894 = vpop.f32.mrb[0].mxu0
  %v1895 = vadd.f32 %v1173, %v1894
  %v1896 = vpop.f32.mrb[0].mxu0
  %v1897 = vpop.f32.mrb[0].mxu0
  %v1898 = vadd.f32 %v1173, %v1897
  %v1899 = vpop.f32.mrb[0].mxu0
  %1900 = vmatprep.mubr.bf16.mxu0 0
  %1901 = vmatmul.mubr.bf16.gmra.mrb[0].mxu0 %v1372
  %v1902 = vpop.f32.mrb[0].mxu0
  %v1903 = vadd.f32 %v1173, %v1902
  %v1904 = vpop.f32.mrb[0].mxu0
  %v1905 = vpop.f32.mrb[0].mxu0
  %v1906 = vadd.f32 %v1173, %v1905
  %v1907 = vpop.f32.mrb[0].mxu0
  %1908 = vmatprep.mubr.bf16.mxu0 0
  %1909 = vmatmul.mubr.bf16.gmra.mrb[0].mxu0 %v1375
  %v1910 = vpop.f32.mrb[0].mxu0
  %v1911 = vadd.f32 %v1173, %v1910
  %v1912 = vpop.f32.mrb[0].mxu0
  %v1913 = vpop.f32.mrb[0].mxu0
  %v1914 = vadd.f32 %v1173, %v1913
  %v1915 = vpop.f32.mrb[0].mxu0
  %1916 = vmatprep.mubr.bf16.mxu0 0
  %1917 = vmatmul.mubr.bf16.gmra.mrb[0].mxu0 %v1378
  %v1918 = vpop.f32.mrb[0].mxu0
  %v1919 = vadd.f32 %v1173, %v1918
  %v1920 = vpop.f32.mrb[0].mxu0
  %v1921 = vpop.f32.mrb[0].mxu0
  %v1922 = vadd.f32 %v1173, %v1921
  %v1923 = vpop.f32.mrb[0].mxu0
  %1924 = vdwg.mxu0
  %v1925 = vtanh.pop %v1415
  %v1926 = vtanh.pop %v1418
  %v1927 = vtanh.pop %v1423
  %v1928 = vtanh.pop %v1426
  %v1929 = vtanh.pop %v1431
  %v1930 = vtanh.pop %v1434
  %v1931 = vtanh.pop %v1439
  %v1932 = vtanh.pop %v1442
  %v1933 = vtanh.pop %v1447
  %v1934 = vtanh.pop %v1450
  %v1935 = vtanh.pop %v1455
  %v1936 = vtanh.pop %v1458
  %v1937 = vtanh.pop %v1463
  %v1938 = vtanh.pop %v1466
  %v1939 = vtanh.pop %v1471
  %v1940 = vtanh.pop %v1474
  %v1941 = vtanh.pop %v1479
  %v1942 = vtanh.pop %v1482
  %v1943 = vtanh.pop %v1487
  %v1944 = vtanh.pop %v1490
  %v1945 = vtanh.pop %v1495
  %v1946 = vtanh.pop %v1498
  %v1947 = vtanh.pop %v1503
  %v1948 = vtanh.pop %v1506
  %v1949 = vtanh.pop %v1511
  %v1950 = vtanh.pop %v1514
  %v1951 = vtanh.pop %v1519
  %v1952 = vtanh.pop %v1522
  %v1953 = vtanh.pop %v1527
  %v1954 = vtanh.pop %v1530
  %v1955 = vtanh.pop %v1535
  %v1956 = vtanh.pop %v1538
  %v1957 = vtanh.pop %v1543
  %v1958 = vtanh.pop %v1546
  %v1959 = vtanh.pop %v1551
  %v1960 = vtanh.pop %v1554
  %v1961 = vtanh.pop %v1559
  %v1962 = vtanh.pop %v1562
  %v1963 = vtanh.pop %v1567
  %v1964 = vtanh.pop %v1570
  %v1965 = vtanh.pop %v1575
  %v1966 = vtanh.pop %v1578
  %v1967 = vtanh.pop %v1583
  %v1968 = vtanh.pop %v1586
  %v1969 = vtanh.pop %v1591
  %v1970 = vtanh.pop %v1594
  %v1971 = vtanh.pop %v1599
  %v1972 = vtanh.pop %v1602
  %v1973 = vtanh.pop %v1607
  %v1974 = vtanh.pop %v1610
  %v1975 = vtanh.pop %v1615
  %v1976 = vtanh.pop %v1618
  %v1977 = vtanh.pop %v1623
  %v1978 = vtanh.pop %v1626
  %v1979 = vtanh.pop %v1631
  %v1980 = vtanh.pop %v1634
  %v1981 = vtanh.pop %v1639
  %v1982 = vtanh.pop %v1642
  %v1983 = vtanh.pop %v1647
  %v1984 = vtanh.pop %v1650
  %v1985 = vtanh.pop %v1655
  %v1986 = vtanh.pop %v1658
  %v1987 = vtanh.pop %v1663
  %v1988 = vtanh.pop %v1666
  %v1989 = vtanh.pop %v1671
  %v1990 = vtanh.pop %v1674
  %v1991 = vtanh.pop %v1679
  %v1992 = vtanh.pop %v1682
  %v1993 = vtanh.pop %v1687
  %v1994 = vtanh.pop %v1690
  %v1995 = vtanh.pop %v1695
  %v1996 = vtanh.pop %v1698
  %v1997 = vtanh.pop %v1703
  %v1998 = vtanh.pop %v1706
  %v1999 = vtanh.pop %v1711
  %v2000 = vtanh.pop %v1714
  %v2001 = vtanh.pop %v1719
  %v2002 = vtanh.pop %v1722
  %v2003 = vtanh.pop %v1727
  %v2004 = vtanh.pop %v1730
  %v2005 = vtanh.pop %v1735
  %v2006 = vtanh.pop %v1738
  %v2007 = vtanh.pop %v1743
  %v2008 = vtanh.pop %v1746
  %v2009 = vtanh.pop %v1751
  %v2010 = vtanh.pop %v1754
  %v2011 = vtanh.pop %v1759
  %v2012 = vtanh.pop %v1762
  %v2013 = vtanh.pop %v1767
  %v2014 = vtanh.pop %v1770
  %v2015 = vtanh.pop %v1775
  %v2016 = vtanh.pop %v1778
  %v2017 = vtanh.pop %v1783
  %v2018 = vtanh.pop %v1786
  %v2019 = vtanh.pop %v1791
  %v2020 = vtanh.pop %v1794
  %v2021 = vtanh.pop %v1799
  %v2022 = vtanh.pop %v1802
  %v2023 = vtanh.pop %v1807
  %v2024 = vtanh.pop %v1810
  %v2025 = vtanh.pop %v1815
  %v2026 = vtanh.pop %v1818
  %v2027 = vtanh.pop %v1823
  %v2028 = vtanh.pop %v1826
  %v2029 = vtanh.pop %v1831
  %v2030 = vtanh.pop %v1834
  %v2031 = vtanh.pop %v1839
  %v2032 = vtanh.pop %v1842
  %v2033 = vtanh.pop %v1847
  %v2034 = vtanh.pop %v1850
  %v2035 = vtanh.pop %v1855
  %v2036 = vtanh.pop %v1858
  %v2037 = vtanh.pop %v1863
  %v2038 = vtanh.pop %v1866
  %v2039 = vtanh.pop %v1871
  %v2040 = vtanh.pop %v1874
  %v2041 = vtanh.pop %v1879
  %v2042 = vtanh.pop %v1882
  %v2043 = vtanh.pop %v1887
  %v2044 = vtanh.pop %v1890
  %v2045 = vtanh.pop %v1895
  %v2046 = vtanh.pop %v1898
  %v2047 = vtanh.pop %v1903
  %v2048 = vtanh.pop %v1906
  %v2049 = vtanh.pop %v1911
  %v2050 = vtanh.pop %v1914
  %v2051 = vtanh.pop %v1919
  %v2052 = vtanh.pop %v1922
  %v2053 = vld [vmem:[%s5] sm:$0xff]
  %v2054 = vld [vmem:[%s5 + $0x8] sm:$0xff]
  %v2055 = vld [vmem:[%s5 + $0x10] sm:$0xff]
  %v2056 = vld [vmem:[%s5 + $0x18] sm:$0xff]
  %v2057 = vld [vmem:[%s6] sm:$0x1]
  %v2059 = vlaneseq
  %v2060 = vshrl.u32 %v2059, 7
  %v2061 = vsub.s32 0, %v2060
  %v2062 = vrot.slane %v2057, %v2061
  %v2065 = vsel %vm1187, %v1925, 0
  %v2068 = vsel %vm1187, %v1926, 0
  %v2071 = vsel %vm1187, %v1927, 0
  %v2074 = vsel %vm1187, %v1928, 0
  %v2077 = vsel %vm1187, %v1929, 0
  %v2080 = vsel %vm1187, %v1930, 0
  %v2083 = vsel %vm1187, %v1931, 0
  %v2086 = vsel %vm1187, %v1932, 0
  %v2089 = vsel %vm1187, %v1933, 0
  %v2092 = vsel %vm1187, %v1934, 0
  %v2095 = vsel %vm1187, %v1935, 0
  %v2098 = vsel %vm1187, %v1936, 0
  %v2101 = vsel %vm1187, %v1937, 0
  %v2104 = vsel %vm1187, %v1938, 0
  %v2107 = vsel %vm1187, %v1939, 0
  %v2110 = vsel %vm1187, %v1940, 0
  %v2113 = vsel %vm1187, %v1941, 0
  %v2116 = vsel %vm1187, %v1942, 0
  %v2119 = vsel %vm1187, %v1943, 0
  %v2122 = vsel %vm1187, %v1944, 0
  %v2125 = vsel %vm1187, %v1945, 0
  %v2128 = vsel %vm1187, %v1946, 0
  %v2131 = vsel %vm1187, %v1947, 0
  %v2134 = vsel %vm1187, %v1948, 0
  %v2137 = vsel %vm1187, %v1949, 0
  %v2140 = vsel %vm1187, %v1950, 0
  %v2143 = vsel %vm1187, %v1951, 0
  %v2146 = vsel %vm1187, %v1952, 0
  %v2149 = vsel %vm1187, %v1953, 0
  %v2152 = vsel %vm1187, %v1954, 0
  %v2155 = vsel %vm1187, %v1955, 0
  %v2158 = vsel %vm1187, %v1956, 0
  %v2161 = vsel %vm1187, %v1957, 0
  %v2164 = vsel %vm1187, %v1958, 0
  %v2167 = vsel %vm1187, %v1959, 0
  %v2170 = vsel %vm1187, %v1960, 0
  %v2173 = vsel %vm1187, %v1961, 0
  %v2176 = vsel %vm1187, %v1962, 0
  %v2179 = vsel %vm1187, %v1963, 0
  %v2182 = vsel %vm1187, %v1964, 0
  %v2185 = vsel %vm1187, %v1965, 0
  %v2188 = vsel %vm1187, %v1966, 0
  %v2191 = vsel %vm1187, %v1967, 0
  %v2194 = vsel %vm1187, %v1968, 0
  %v2197 = vsel %vm1187, %v1969, 0
  %v2200 = vsel %vm1187, %v1970, 0
  %v2203 = vsel %vm1187, %v1971, 0
  %v2206 = vsel %vm1187, %v1972, 0
  %v2209 = vsel %vm1187, %v1973, 0
  %v2212 = vsel %vm1187, %v1974, 0
  %v2215 = vsel %vm1187, %v1975, 0
  %v2218 = vsel %vm1187, %v1976, 0
  %v2221 = vsel %vm1187, %v1977, 0
  %v2224 = vsel %vm1187, %v1978, 0
  %v2227 = vsel %vm1187, %v1979, 0
  %v2230 = vsel %vm1187, %v1980, 0
  %v2233 = vsel %vm1187, %v1981, 0
  %v2236 = vsel %vm1187, %v1982, 0
  %v2239 = vsel %vm1187, %v1983, 0
  %v2242 = vsel %vm1187, %v1984, 0
  %v2245 = vsel %vm1187, %v1985, 0
  %v2248 = vsel %vm1187, %v1986, 0
  %v2251 = vsel %vm1187, %v1987, 0
  %v2254 = vsel %vm1187, %v1988, 0
  %v2257 = vsel %vm1187, %v1989, 0
  %v2260 = vsel %vm1187, %v1990, 0
  %v2263 = vsel %vm1187, %v1991, 0
  %v2266 = vsel %vm1187, %v1992, 0
  %v2269 = vsel %vm1187, %v1993, 0
  %v2272 = vsel %vm1187, %v1994, 0
  %v2275 = vsel %vm1187, %v1995, 0
  %v2278 = vsel %vm1187, %v1996, 0
  %v2281 = vsel %vm1187, %v1997, 0
  %v2284 = vsel %vm1187, %v1998, 0
  %v2287 = vsel %vm1187, %v1999, 0
  %v2290 = vsel %vm1187, %v2000, 0
  %v2293 = vsel %vm1187, %v2001, 0
  %v2296 = vsel %vm1187, %v2002, 0
  %v2299 = vsel %vm1187, %v2003, 0
  %v2302 = vsel %vm1187, %v2004, 0
  %v2305 = vsel %vm1187, %v2005, 0
  %v2308 = vsel %vm1187, %v2006, 0
  %v2311 = vsel %vm1187, %v2007, 0
  %v2314 = vsel %vm1187, %v2008, 0
  %v2317 = vsel %vm1187, %v2009, 0
  %v2320 = vsel %vm1187, %v2010, 0
  %v2323 = vsel %vm1187, %v2011, 0
  %v2326 = vsel %vm1187, %v2012, 0
  %v2329 = vsel %vm1187, %v2013, 0
  %v2332 = vsel %vm1187, %v2014, 0
  %v2335 = vsel %vm1187, %v2015, 0
  %v2338 = vsel %vm1187, %v2016, 0
  %v2341 = vsel %vm1187, %v2017, 0
  %v2344 = vsel %vm1187, %v2018, 0
  %v2347 = vsel %vm1187, %v2019, 0
  %v2350 = vsel %vm1187, %v2020, 0
  %v2353 = vsel %vm1187, %v2021, 0
  %v2356 = vsel %vm1187, %v2022, 0
  %v2359 = vsel %vm1187, %v2023, 0
  %v2362 = vsel %vm1187, %v2024, 0
  %v2365 = vsel %vm1187, %v2025, 0
  %v2368 = vsel %vm1187, %v2026, 0
  %v2371 = vsel %vm1187, %v2027, 0
  %v2374 = vsel %vm1187, %v2028, 0
  %v2377 = vsel %vm1187, %v2029, 0
  %v2380 = vsel %vm1187, %v2030, 0
  %v2383 = vsel %vm1187, %v2031, 0
  %v2386 = vsel %vm1187, %v2032, 0
  %v2389 = vsel %vm1187, %v2033, 0
  %v2392 = vsel %vm1187, %v2034, 0
  %v2395 = vsel %vm1187, %v2035, 0
  %v2398 = vsel %vm1187, %v2036, 0
  %v2401 = vsel %vm1187, %v2037, 0
  %v2404 = vsel %vm1187, %v2038, 0
  %v2407 = vsel %vm1187, %v2039, 0
  %v2410 = vsel %vm1187, %v2040, 0
  %v2413 = vsel %vm1187, %v2041, 0
  %v2416 = vsel %vm1187, %v2042, 0
  %v2419 = vsel %vm1187, %v2043, 0
  %v2422 = vsel %vm1187, %v2044, 0
  %v2425 = vsel %vm1187, %v2045, 0
  %v2428 = vsel %vm1187, %v2046, 0
  %v2431 = vsel %vm1187, %v2047, 0
  %v2434 = vsel %vm1187, %v2048, 0
  %v2437 = vsel %vm1187, %v2049, 0
  %v2440 = vsel %vm1187, %v2050, 0
  %v2443 = vsel %vm1187, %v2051, 0
  %v2446 = vsel %vm1187, %v2052, 0
  %2448 = vmatprep.subr.mxu0 0.0
  %2449 = vmatpush1.msra.mxu0 %v2053
  %2450 = vmatprep.subr.mxu0 0.0
  %2451 = vmatpush1.msra.mxu0 %v2054
  %2452 = vmatprep.subr.mxu0 0.0
  %2453 = vmatpush1.msra.mxu0 %v2055
  %2454 = vmatprep.subr.mxu0 0.0
  %2455 = vmatpush1.msra.mxu0 %v2056
  %2456 = vmatprep.subr.mxu0 0.0
  %2457 = vmatpush1.msra.mxu0 0.0
  %2458 = vmatprep.subr.mxu0 0.0
  %2459 = vmatpush1.msra.mxu0 0.0
  %2460 = vmatprep.subr.mxu0 0.0
  %2461 = vmatpush1.msra.mxu0 0.0
  %2462 = vmatprep.subr.mxu0 0.0
  %2463 = vmatpush1.msra.mxu0 0.0
  %2464 = vmatprep.subr.mxu0 0.0
  %2465 = vmatpush1.msra.mxu0 0.0
  %2466 = vmatprep.subr.mxu0 0.0
  %2467 = vmatpush1.msra.mxu0 0.0
  %2468 = vmatprep.subr.mxu0 0.0
  %2469 = vmatpush1.msra.mxu0 0.0
  %2470 = vmatprep.subr.mxu0 0.0
  %2471 = vmatpush1.msra.mxu0 0.0
  %2472 = vmatprep.subr.mxu0 0.0
  %2473 = vmatpush1.msra.mxu0 0.0
  %2474 = vmatprep.subr.mxu0 0.0
  %2475 = vmatpush1.msra.mxu0 0.0
  %2476 = vmatprep.subr.mxu0 0.0
  %2477 = vmatpush1.msra.mxu0 0.0
  %2478 = vmatprep.subr.mxu0 0.0
  %2479 = vmatpush1.msra.mxu0 0.0
  %2480 = vmatprep.subr.mxu0 0.0
  %2481 = vmatpush1.msra.mxu0 0.0
  %2482 = vmatprep.subr.mxu0 0.0
  %2483 = vmatpush1.msra.mxu0 0.0
  %2484 = vmatprep.subr.mxu0 0.0
  %2485 = vmatpush1.msra.mxu0 0.0
  %2486 = vmatprep.subr.mxu0 0.0
  %2487 = vmatpush1.msra.mxu0 0.0
  %2488 = vmatprep.subr.mxu0 0.0
  %2489 = vmatpush1.msra.mxu0 0.0
  %2490 = vmatprep.subr.mxu0 0.0
  %2491 = vmatpush1.msra.mxu0 0.0
  %2492 = vmatprep.subr.mxu0 0.0
  %2493 = vmatpush1.msra.mxu0 0.0
  %2494 = vmatprep.subr.mxu0 0.0
  %2495 = vmatpush1.msra.mxu0 0.0
  %2496 = vmatprep.subr.mxu0 0.0
  %2497 = vmatpush1.msra.mxu0 0.0
  %2498 = vmatprep.subr.mxu0 0.0
  %2499 = vmatpush1.msra.mxu0 0.0
  %2500 = vmatprep.subr.mxu0 0.0
  %2501 = vmatpush1.msra.mxu0 0.0
  %2502 = vmatprep.subr.mxu0 0.0
  %2503 = vmatpush1.msra.mxu0 0.0
  %2504 = vmatprep.subr.mxu0 0.0
  %2505 = vmatpush1.msra.mxu0 0.0
  %2506 = vmatprep.subr.mxu0 0.0
  %2507 = vmatpush1.msra.mxu0 0.0
  %2508 = vmatprep.subr.mxu0 0.0
  %2509 = vmatpush1.msra.mxu0 0.0
  %2510 = vmatprep.subr.mxu0 0.0
  %2511 = vmatpush1.msra.mxu0 0.0
  %2512 = vmatprep.mubr.f32.mxu0 0.0
  %2513 = vmatmul.mubr.f32.gmra.mrb[0].mxu0 %v2065
  %v2514 = vpop.f32.mrb[0].mxu0
  %v2515 = vadd.f32 %v2062, %v2514
  %v2516 = vpop.f32.mrb[0].mxu0
  %2517 = vmatprep.mubr.f32.mxu0 0.0
  %2518 = vmatmul.mubr.f32.gmra.mrb[0].mxu0 %v2068
  %v2519 = vpop.f32.mrb[0].mxu0
  %v2520 = vadd.f32 %v2062, %v2519
  %v2521 = vpop.f32.mrb[0].mxu0
  %2522 = vmatprep.mubr.f32.mxu0 0.0
  %2523 = vmatmul.mubr.f32.gmra.mrb[0].mxu0 %v2071
  %v2524 = vpop.f32.mrb[0].mxu0
  %v2525 = vadd.f32 %v2062, %v2524
  %v2526 = vpop.f32.mrb[0].mxu0
  %2527 = vmatprep.mubr.f32.mxu0 0.0
  %2528 = vmatmul.mubr.f32.gmra.mrb[0].mxu0 %v2074
  %v2529 = vpop.f32.mrb[0].mxu0
  %v2530 = vadd.f32 %v2062, %v2529
  %v2531 = vpop.f32.mrb[0].mxu0
  %2532 = vmatprep.mubr.f32.mxu0 0.0
  %2533 = vmatmul.mubr.f32.gmra.mrb[0].mxu0 %v2077
  %v2534 = vpop.f32.mrb[0].mxu0
  %v2535 = vadd.f32 %v2062, %v2534
  %v2536 = vpop.f32.mrb[0].mxu0
  %2537 = vmatprep.mubr.f32.mxu0 0.0
  %2538 = vmatmul.mubr.f32.gmra.mrb[0].mxu0 %v2080
  %v2539 = vpop.f32.mrb[0].mxu0
  %v2540 = vadd.f32 %v2062, %v2539
  %v2541 = vpop.f32.mrb[0].mxu0
  %2542 = vmatprep.mubr.f32.mxu0 0.0
  %2543 = vmatmul.mubr.f32.gmra.mrb[0].mxu0 %v2083
  %v2544 = vpop.f32.mrb[0].mxu0
  %v2545 = vadd.f32 %v2062, %v2544
  %v2546 = vpop.f32.mrb[0].mxu0
  %2547 = vmatprep.mubr.f32.mxu0 0.0
  %2548 = vmatmul.mubr.f32.gmra.mrb[0].mxu0 %v2086
  %v2549 = vpop.f32.mrb[0].mxu0
  %v2550 = vadd.f32 %v2062, %v2549
  %v2551 = vpop.f32.mrb[0].mxu0
  %2552 = vmatprep.mubr.f32.mxu0 0.0
  %2553 = vmatmul.mubr.f32.gmra.mrb[0].mxu0 %v2089
  %v2554 = vpop.f32.mrb[0].mxu0
  %v2555 = vadd.f32 %v2062, %v2554
  %v2556 = vpop.f32.mrb[0].mxu0
  %2557 = vmatprep.mubr.f32.mxu0 0.0
  %2558 = vmatmul.mubr.f32.gmra.mrb[0].mxu0 %v2092
  %v2559 = vpop.f32.mrb[0].mxu0
  %v2560 = vadd.f32 %v2062, %v2559
  %v2561 = vpop.f32.mrb[0].mxu0
  %2562 = vmatprep.mubr.f32.mxu0 0.0
  %2563 = vmatmul.mubr.f32.gmra.mrb[0].mxu0 %v2095
  %v2564 = vpop.f32.mrb[0].mxu0
  %v2565 = vadd.f32 %v2062, %v2564
  %v2566 = vpop.f32.mrb[0].mxu0
  %2567 = vmatprep.mubr.f32.mxu0 0.0
  %2568 = vmatmul.mubr.f32.gmra.mrb[0].mxu0 %v2098
  %v2569 = vpop.f32.mrb[0].mxu0
  %v2570 = vadd.f32 %v2062, %v2569
  %v2571 = vpop.f32.mrb[0].mxu0
  %2572 = vmatprep.mubr.f32.mxu0 0.0
  %2573 = vmatmul.mubr.f32.gmra.mrb[0].mxu0 %v2101
  %v2574 = vpop.f32.mrb[0].mxu0
  %v2575 = vadd.f32 %v2062, %v2574
  %v2576 = vpop.f32.mrb[0].mxu0
  %2577 = vmatprep.mubr.f32.mxu0 0.0
  %2578 = vmatmul.mubr.f32.gmra.mrb[0].mxu0 %v2104
  %v2579 = vpop.f32.mrb[0].mxu0
  %v2580 = vadd.f32 %v2062, %v2579
  %v2581 = vpop.f32.mrb[0].mxu0
  %2582 = vmatprep.mubr.f32.mxu0 0.0
  %2583 = vmatmul.mubr.f32.gmra.mrb[0].mxu0 %v2107
  %v2584 = vpop.f32.mrb[0].mxu0
  %v2585 = vadd.f32 %v2062, %v2584
  %v2586 = vpop.f32.mrb[0].mxu0
  %2587 = vmatprep.mubr.f32.mxu0 0.0
  %2588 = vmatmul.mubr.f32.gmra.mrb[0].mxu0 %v2110
  %v2589 = vpop.f32.mrb[0].mxu0
  %v2590 = vadd.f32 %v2062, %v2589
  %v2591 = vpop.f32.mrb[0].mxu0
  %2592 = vmatprep.mubr.f32.mxu0 0.0
  %2593 = vmatmul.mubr.f32.gmra.mrb[0].mxu0 %v2113
  %v2594 = vpop.f32.mrb[0].mxu0
  %v2595 = vadd.f32 %v2062, %v2594
  %v2596 = vpop.f32.mrb[0].mxu0
  %2597 = vmatprep.mubr.f32.mxu0 0.0
  %2598 = vmatmul.mubr.f32.gmra.mrb[0].mxu0 %v2116
  %v2599 = vpop.f32.mrb[0].mxu0
  %v2600 = vadd.f32 %v2062, %v2599
  %v2601 = vpop.f32.mrb[0].mxu0
  %2602 = vmatprep.mubr.f32.mxu0 0.0
  %2603 = vmatmul.mubr.f32.gmra.mrb[0].mxu0 %v2119
  %v2604 = vpop.f32.mrb[0].mxu0
  %v2605 = vadd.f32 %v2062, %v2604
  %v2606 = vpop.f32.mrb[0].mxu0
  %2607 = vmatprep.mubr.f32.mxu0 0.0
  %2608 = vmatmul.mubr.f32.gmra.mrb[0].mxu0 %v2122
  %v2609 = vpop.f32.mrb[0].mxu0
  %v2610 = vadd.f32 %v2062, %v2609
  %v2611 = vpop.f32.mrb[0].mxu0
  %2612 = vmatprep.mubr.f32.mxu0 0.0
  %2613 = vmatmul.mubr.f32.gmra.mrb[0].mxu0 %v2125
  %v2614 = vpop.f32.mrb[0].mxu0
  %v2615 = vadd.f32 %v2062, %v2614
  %v2616 = vpop.f32.mrb[0].mxu0
  %2617 = vmatprep.mubr.f32.mxu0 0.0
  %2618 = vmatmul.mubr.f32.gmra.mrb[0].mxu0 %v2128
  %v2619 = vpop.f32.mrb[0].mxu0
  %v2620 = vadd.f32 %v2062, %v2619
  %v2621 = vpop.f32.mrb[0].mxu0
  %2622 = vmatprep.mubr.f32.mxu0 0.0
  %2623 = vmatmul.mubr.f32.gmra.mrb[0].mxu0 %v2131
  %v2624 = vpop.f32.mrb[0].mxu0
  %v2625 = vadd.f32 %v2062, %v2624
  %v2626 = vpop.f32.mrb[0].mxu0
  %2627 = vmatprep.mubr.f32.mxu0 0.0
  %2628 = vmatmul.mubr.f32.gmra.mrb[0].mxu0 %v2134
  %v2629 = vpop.f32.mrb[0].mxu0
  %v2630 = vadd.f32 %v2062, %v2629
  %v2631 = vpop.f32.mrb[0].mxu0
  %2632 = vmatprep.mubr.f32.mxu0 0.0
  %2633 = vmatmul.mubr.f32.gmra.mrb[0].mxu0 %v2137
  %v2634 = vpop.f32.mrb[0].mxu0
  %v2635 = vadd.f32 %v2062, %v2634
  %v2636 = vpop.f32.mrb[0].mxu0
  %2637 = vmatprep.mubr.f32.mxu0 0.0
  %2638 = vmatmul.mubr.f32.gmra.mrb[0].mxu0 %v2140
  %v2639 = vpop.f32.mrb[0].mxu0
  %v2640 = vadd.f32 %v2062, %v2639
  %v2641 = vpop.f32.mrb[0].mxu0
  %2642 = vmatprep.mubr.f32.mxu0 0.0
  %2643 = vmatmul.mubr.f32.gmra.mrb[0].mxu0 %v2143
  %v2644 = vpop.f32.mrb[0].mxu0
  %v2645 = vadd.f32 %v2062, %v2644
  %v2646 = vpop.f32.mrb[0].mxu0
  %2647 = vmatprep.mubr.f32.mxu0 0.0
  %2648 = vmatmul.mubr.f32.gmra.mrb[0].mxu0 %v2146
  %v2649 = vpop.f32.mrb[0].mxu0
  %v2650 = vadd.f32 %v2062, %v2649
  %v2651 = vpop.f32.mrb[0].mxu0
  %2652 = vmatprep.mubr.f32.mxu0 0.0
  %2653 = vmatmul.mubr.f32.gmra.mrb[0].mxu0 %v2149
  %v2654 = vpop.f32.mrb[0].mxu0
  %v2655 = vadd.f32 %v2062, %v2654
  %v2656 = vpop.f32.mrb[0].mxu0
  %2657 = vmatprep.mubr.f32.mxu0 0.0
  %2658 = vmatmul.mubr.f32.gmra.mrb[0].mxu0 %v2152
  %v2659 = vpop.f32.mrb[0].mxu0
  %v2660 = vadd.f32 %v2062, %v2659
  %v2661 = vpop.f32.mrb[0].mxu0
  %2662 = vmatprep.mubr.f32.mxu0 0.0
  %2663 = vmatmul.mubr.f32.gmra.mrb[0].mxu0 %v2155
  %v2664 = vpop.f32.mrb[0].mxu0
  %v2665 = vadd.f32 %v2062, %v2664
  %v2666 = vpop.f32.mrb[0].mxu0
  %2667 = vmatprep.mubr.f32.mxu0 0.0
  %2668 = vmatmul.mubr.f32.gmra.mrb[0].mxu0 %v2158
  %v2669 = vpop.f32.mrb[0].mxu0
  %v2670 = vadd.f32 %v2062, %v2669
  %v2671 = vpop.f32.mrb[0].mxu0
  %2672 = vmatprep.mubr.f32.mxu0 0.0
  %2673 = vmatmul.mubr.f32.gmra.mrb[0].mxu0 %v2161
  %v2674 = vpop.f32.mrb[0].mxu0
  %v2675 = vadd.f32 %v2062, %v2674
  %v2676 = vpop.f32.mrb[0].mxu0
  %2677 = vmatprep.mubr.f32.mxu0 0.0
  %2678 = vmatmul.mubr.f32.gmra.mrb[0].mxu0 %v2164
  %v2679 = vpop.f32.mrb[0].mxu0
  %v2680 = vadd.f32 %v2062, %v2679
  %v2681 = vpop.f32.mrb[0].mxu0
  %2682 = vmatprep.mubr.f32.mxu0 0.0
  %2683 = vmatmul.mubr.f32.gmra.mrb[0].mxu0 %v2167
  %v2684 = vpop.f32.mrb[0].mxu0
  %v2685 = vadd.f32 %v2062, %v2684
  %v2686 = vpop.f32.mrb[0].mxu0
  %2687 = vmatprep.mubr.f32.mxu0 0.0
  %2688 = vmatmul.mubr.f32.gmra.mrb[0].mxu0 %v2170
  %v2689 = vpop.f32.mrb[0].mxu0
  %v2690 = vadd.f32 %v2062, %v2689
  %v2691 = vpop.f32.mrb[0].mxu0
  %2692 = vmatprep.mubr.f32.mxu0 0.0
  %2693 = vmatmul.mubr.f32.gmra.mrb[0].mxu0 %v2173
  %v2694 = vpop.f32.mrb[0].mxu0
  %v2695 = vadd.f32 %v2062, %v2694
  %v2696 = vpop.f32.mrb[0].mxu0
  %2697 = vmatprep.mubr.f32.mxu0 0.0
  %2698 = vmatmul.mubr.f32.gmra.mrb[0].mxu0 %v2176
  %v2699 = vpop.f32.mrb[0].mxu0
  %v2700 = vadd.f32 %v2062, %v2699
  %v2701 = vpop.f32.mrb[0].mxu0
  %2702 = vmatprep.mubr.f32.mxu0 0.0
  %2703 = vmatmul.mubr.f32.gmra.mrb[0].mxu0 %v2179
  %v2704 = vpop.f32.mrb[0].mxu0
  %v2705 = vadd.f32 %v2062, %v2704
  %v2706 = vpop.f32.mrb[0].mxu0
  %2707 = vmatprep.mubr.f32.mxu0 0.0
  %2708 = vmatmul.mubr.f32.gmra.mrb[0].mxu0 %v2182
  %v2709 = vpop.f32.mrb[0].mxu0
  %v2710 = vadd.f32 %v2062, %v2709
  %v2711 = vpop.f32.mrb[0].mxu0
  %2712 = vmatprep.mubr.f32.mxu0 0.0
  %2713 = vmatmul.mubr.f32.gmra.mrb[0].mxu0 %v2185
  %v2714 = vpop.f32.mrb[0].mxu0
  %v2715 = vadd.f32 %v2062, %v2714
  %v2716 = vpop.f32.mrb[0].mxu0
  %2717 = vmatprep.mubr.f32.mxu0 0.0
  %2718 = vmatmul.mubr.f32.gmra.mrb[0].mxu0 %v2188
  %v2719 = vpop.f32.mrb[0].mxu0
  %v2720 = vadd.f32 %v2062, %v2719
  %v2721 = vpop.f32.mrb[0].mxu0
  %2722 = vmatprep.mubr.f32.mxu0 0.0
  %2723 = vmatmul.mubr.f32.gmra.mrb[0].mxu0 %v2191
  %v2724 = vpop.f32.mrb[0].mxu0
  %v2725 = vadd.f32 %v2062, %v2724
  %v2726 = vpop.f32.mrb[0].mxu0
  %2727 = vmatprep.mubr.f32.mxu0 0.0
  %2728 = vmatmul.mubr.f32.gmra.mrb[0].mxu0 %v2194
  %v2729 = vpop.f32.mrb[0].mxu0
  %v2730 = vadd.f32 %v2062, %v2729
  %v2731 = vpop.f32.mrb[0].mxu0
  %2732 = vmatprep.mubr.f32.mxu0 0.0
  %2733 = vmatmul.mubr.f32.gmra.mrb[0].mxu0 %v2197
  %v2734 = vpop.f32.mrb[0].mxu0
  %v2735 = vadd.f32 %v2062, %v2734
  %v2736 = vpop.f32.mrb[0].mxu0
  %2737 = vmatprep.mubr.f32.mxu0 0.0
  %2738 = vmatmul.mubr.f32.gmra.mrb[0].mxu0 %v2200
  %v2739 = vpop.f32.mrb[0].mxu0
  %v2740 = vadd.f32 %v2062, %v2739
  %v2741 = vpop.f32.mrb[0].mxu0
  %2742 = vmatprep.mubr.f32.mxu0 0.0
  %2743 = vmatmul.mubr.f32.gmra.mrb[0].mxu0 %v2203
  %v2744 = vpop.f32.mrb[0].mxu0
  %v2745 = vadd.f32 %v2062, %v2744
  %v2746 = vpop.f32.mrb[0].mxu0
  %2747 = vmatprep.mubr.f32.mxu0 0.0
  %2748 = vmatmul.mubr.f32.gmra.mrb[0].mxu0 %v2206
  %v2749 = vpop.f32.mrb[0].mxu0
  %v2750 = vadd.f32 %v2062, %v2749
  %v2751 = vpop.f32.mrb[0].mxu0
  %2752 = vmatprep.mubr.f32.mxu0 0.0
  %2753 = vmatmul.mubr.f32.gmra.mrb[0].mxu0 %v2209
  %v2754 = vpop.f32.mrb[0].mxu0
  %v2755 = vadd.f32 %v2062, %v2754
  %v2756 = vpop.f32.mrb[0].mxu0
  %2757 = vmatprep.mubr.f32.mxu0 0.0
  %2758 = vmatmul.mubr.f32.gmra.mrb[0].mxu0 %v2212
  %v2759 = vpop.f32.mrb[0].mxu0
  %v2760 = vadd.f32 %v2062, %v2759
  %v2761 = vpop.f32.mrb[0].mxu0
  %2762 = vmatprep.mubr.f32.mxu0 0.0
  %2763 = vmatmul.mubr.f32.gmra.mrb[0].mxu0 %v2215
  %v2764 = vpop.f32.mrb[0].mxu0
  %v2765 = vadd.f32 %v2062, %v2764
  %v2766 = vpop.f32.mrb[0].mxu0
  %2767 = vmatprep.mubr.f32.mxu0 0.0
  %2768 = vmatmul.mubr.f32.gmra.mrb[0].mxu0 %v2218
  %v2769 = vpop.f32.mrb[0].mxu0
  %v2770 = vadd.f32 %v2062, %v2769
  %v2771 = vpop.f32.mrb[0].mxu0
  %2772 = vmatprep.mubr.f32.mxu0 0.0
  %2773 = vmatmul.mubr.f32.gmra.mrb[0].mxu0 %v2221
  %v2774 = vpop.f32.mrb[0].mxu0
  %v2775 = vadd.f32 %v2062, %v2774
  %v2776 = vpop.f32.mrb[0].mxu0
  %2777 = vmatprep.mubr.f32.mxu0 0.0
  %2778 = vmatmul.mubr.f32.gmra.mrb[0].mxu0 %v2224
  %v2779 = vpop.f32.mrb[0].mxu0
  %v2780 = vadd.f32 %v2062, %v2779
  %v2781 = vpop.f32.mrb[0].mxu0
  %2782 = vmatprep.mubr.f32.mxu0 0.0
  %2783 = vmatmul.mubr.f32.gmra.mrb[0].mxu0 %v2227
  %v2784 = vpop.f32.mrb[0].mxu0
  %v2785 = vadd.f32 %v2062, %v2784
  %v2786 = vpop.f32.mrb[0].mxu0
  %2787 = vmatprep.mubr.f32.mxu0 0.0
  %2788 = vmatmul.mubr.f32.gmra.mrb[0].mxu0 %v2230
  %v2789 = vpop.f32.mrb[0].mxu0
  %v2790 = vadd.f32 %v2062, %v2789
  %v2791 = vpop.f32.mrb[0].mxu0
  %2792 = vmatprep.mubr.f32.mxu0 0.0
  %2793 = vmatmul.mubr.f32.gmra.mrb[0].mxu0 %v2233
  %v2794 = vpop.f32.mrb[0].mxu0
  %v2795 = vadd.f32 %v2062, %v2794
  %v2796 = vpop.f32.mrb[0].mxu0
  %2797 = vmatprep.mubr.f32.mxu0 0.0
  %2798 = vmatmul.mubr.f32.gmra.mrb[0].mxu0 %v2236
  %v2799 = vpop.f32.mrb[0].mxu0
  %v2800 = vadd.f32 %v2062, %v2799
  %v2801 = vpop.f32.mrb[0].mxu0
  %2802 = vmatprep.mubr.f32.mxu0 0.0
  %2803 = vmatmul.mubr.f32.gmra.mrb[0].mxu0 %v2239
  %v2804 = vpop.f32.mrb[0].mxu0
  %v2805 = vadd.f32 %v2062, %v2804
  %v2806 = vpop.f32.mrb[0].mxu0
  %2807 = vmatprep.mubr.f32.mxu0 0.0
  %2808 = vmatmul.mubr.f32.gmra.mrb[0].mxu0 %v2242
  %v2809 = vpop.f32.mrb[0].mxu0
  %v2810 = vadd.f32 %v2062, %v2809
  %v2811 = vpop.f32.mrb[0].mxu0
  %2812 = vmatprep.mubr.f32.mxu0 0.0
  %2813 = vmatmul.mubr.f32.gmra.mrb[0].mxu0 %v2245
  %v2814 = vpop.f32.mrb[0].mxu0
  %v2815 = vadd.f32 %v2062, %v2814
  %v2816 = vpop.f32.mrb[0].mxu0
  %2817 = vmatprep.mubr.f32.mxu0 0.0
  %2818 = vmatmul.mubr.f32.gmra.mrb[0].mxu0 %v2248
  %v2819 = vpop.f32.mrb[0].mxu0
  %v2820 = vadd.f32 %v2062, %v2819
  %v2821 = vpop.f32.mrb[0].mxu0
  %2822 = vmatprep.mubr.f32.mxu0 0.0
  %2823 = vmatmul.mubr.f32.gmra.mrb[0].mxu0 %v2251
  %v2824 = vpop.f32.mrb[0].mxu0
  %v2825 = vadd.f32 %v2062, %v2824
  %v2826 = vpop.f32.mrb[0].mxu0
  %2827 = vmatprep.mubr.f32.mxu0 0.0
  %2828 = vmatmul.mubr.f32.gmra.mrb[0].mxu0 %v2254
  %v2829 = vpop.f32.mrb[0].mxu0
  %v2830 = vadd.f32 %v2062, %v2829
  %v2831 = vpop.f32.mrb[0].mxu0
  %2832 = vmatprep.mubr.f32.mxu0 0.0
  %2833 = vmatmul.mubr.f32.gmra.mrb[0].mxu0 %v2257
  %v2834 = vpop.f32.mrb[0].mxu0
  %v2835 = vadd.f32 %v2062, %v2834
  %v2836 = vpop.f32.mrb[0].mxu0
  %2837 = vmatprep.mubr.f32.mxu0 0.0
  %2838 = vmatmul.mubr.f32.gmra.mrb[0].mxu0 %v2260
  %v2839 = vpop.f32.mrb[0].mxu0
  %v2840 = vadd.f32 %v2062, %v2839
  %v2841 = vpop.f32.mrb[0].mxu0
  %2842 = vmatprep.mubr.f32.mxu0 0.0
  %2843 = vmatmul.mubr.f32.gmra.mrb[0].mxu0 %v2263
  %v2844 = vpop.f32.mrb[0].mxu0
  %v2845 = vadd.f32 %v2062, %v2844
  %v2846 = vpop.f32.mrb[0].mxu0
  %2847 = vmatprep.mubr.f32.mxu0 0.0
  %2848 = vmatmul.mubr.f32.gmra.mrb[0].mxu0 %v2266
  %v2849 = vpop.f32.mrb[0].mxu0
  %v2850 = vadd.f32 %v2062, %v2849
  %v2851 = vpop.f32.mrb[0].mxu0
  %2852 = vmatprep.mubr.f32.mxu0 0.0
  %2853 = vmatmul.mubr.f32.gmra.mrb[0].mxu0 %v2269
  %v2854 = vpop.f32.mrb[0].mxu0
  %v2855 = vadd.f32 %v2062, %v2854
  %v2856 = vpop.f32.mrb[0].mxu0
  %2857 = vmatprep.mubr.f32.mxu0 0.0
  %2858 = vmatmul.mubr.f32.gmra.mrb[0].mxu0 %v2272
  %v2859 = vpop.f32.mrb[0].mxu0
  %v2860 = vadd.f32 %v2062, %v2859
  %v2861 = vpop.f32.mrb[0].mxu0
  %2862 = vmatprep.mubr.f32.mxu0 0.0
  %2863 = vmatmul.mubr.f32.gmra.mrb[0].mxu0 %v2275
  %v2864 = vpop.f32.mrb[0].mxu0
  %v2865 = vadd.f32 %v2062, %v2864
  %v2866 = vpop.f32.mrb[0].mxu0
  %2867 = vmatprep.mubr.f32.mxu0 0.0
  %2868 = vmatmul.mubr.f32.gmra.mrb[0].mxu0 %v2278
  %v2869 = vpop.f32.mrb[0].mxu0
  %v2870 = vadd.f32 %v2062, %v2869
  %v2871 = vpop.f32.mrb[0].mxu0
  %2872 = vmatprep.mubr.f32.mxu0 0.0
  %2873 = vmatmul.mubr.f32.gmra.mrb[0].mxu0 %v2281
  %v2874 = vpop.f32.mrb[0].mxu0
  %v2875 = vadd.f32 %v2062, %v2874
  %v2876 = vpop.f32.mrb[0].mxu0
  %2877 = vmatprep.mubr.f32.mxu0 0.0
  %2878 = vmatmul.mubr.f32.gmra.mrb[0].mxu0 %v2284
  %v2879 = vpop.f32.mrb[0].mxu0
  %v2880 = vadd.f32 %v2062, %v2879
  %v2881 = vpop.f32.mrb[0].mxu0
  %2882 = vmatprep.mubr.f32.mxu0 0.0
  %2883 = vmatmul.mubr.f32.gmra.mrb[0].mxu0 %v2287
  %v2884 = vpop.f32.mrb[0].mxu0
  %v2885 = vadd.f32 %v2062, %v2884
  %v2886 = vpop.f32.mrb[0].mxu0
  %2887 = vmatprep.mubr.f32.mxu0 0.0
  %2888 = vmatmul.mubr.f32.gmra.mrb[0].mxu0 %v2290
  %v2889 = vpop.f32.mrb[0].mxu0
  %v2890 = vadd.f32 %v2062, %v2889
  %v2891 = vpop.f32.mrb[0].mxu0
  %2892 = vmatprep.mubr.f32.mxu0 0.0
  %2893 = vmatmul.mubr.f32.gmra.mrb[0].mxu0 %v2293
  %v2894 = vpop.f32.mrb[0].mxu0
  %v2895 = vadd.f32 %v2062, %v2894
  %v2896 = vpop.f32.mrb[0].mxu0
  %2897 = vmatprep.mubr.f32.mxu0 0.0
  %2898 = vmatmul.mubr.f32.gmra.mrb[0].mxu0 %v2296
  %v2899 = vpop.f32.mrb[0].mxu0
  %v2900 = vadd.f32 %v2062, %v2899
  %v2901 = vpop.f32.mrb[0].mxu0
  %2902 = vmatprep.mubr.f32.mxu0 0.0
  %2903 = vmatmul.mubr.f32.gmra.mrb[0].mxu0 %v2299
  %v2904 = vpop.f32.mrb[0].mxu0
  %v2905 = vadd.f32 %v2062, %v2904
  %v2906 = vpop.f32.mrb[0].mxu0
  %2907 = vmatprep.mubr.f32.mxu0 0.0
  %2908 = vmatmul.mubr.f32.gmra.mrb[0].mxu0 %v2302
  %v2909 = vpop.f32.mrb[0].mxu0
  %v2910 = vadd.f32 %v2062, %v2909
  %v2911 = vpop.f32.mrb[0].mxu0
  %2912 = vmatprep.mubr.f32.mxu0 0.0
  %2913 = vmatmul.mubr.f32.gmra.mrb[0].mxu0 %v2305
  %v2914 = vpop.f32.mrb[0].mxu0
  %v2915 = vadd.f32 %v2062, %v2914
  %v2916 = vpop.f32.mrb[0].mxu0
  %2917 = vmatprep.mubr.f32.mxu0 0.0
  %2918 = vmatmul.mubr.f32.gmra.mrb[0].mxu0 %v2308
  %v2919 = vpop.f32.mrb[0].mxu0
  %v2920 = vadd.f32 %v2062, %v2919
  %v2921 = vpop.f32.mrb[0].mxu0
  %2922 = vmatprep.mubr.f32.mxu0 0.0
  %2923 = vmatmul.mubr.f32.gmra.mrb[0].mxu0 %v2311
  %v2924 = vpop.f32.mrb[0].mxu0
  %v2925 = vadd.f32 %v2062, %v2924
  %v2926 = vpop.f32.mrb[0].mxu0
  %2927 = vmatprep.mubr.f32.mxu0 0.0
  %2928 = vmatmul.mubr.f32.gmra.mrb[0].mxu0 %v2314
  %v2929 = vpop.f32.mrb[0].mxu0
  %v2930 = vadd.f32 %v2062, %v2929
  %v2931 = vpop.f32.mrb[0].mxu0
  %2932 = vmatprep.mubr.f32.mxu0 0.0
  %2933 = vmatmul.mubr.f32.gmra.mrb[0].mxu0 %v2317
  %v2934 = vpop.f32.mrb[0].mxu0
  %v2935 = vadd.f32 %v2062, %v2934
  %v2936 = vpop.f32.mrb[0].mxu0
  %2937 = vmatprep.mubr.f32.mxu0 0.0
  %2938 = vmatmul.mubr.f32.gmra.mrb[0].mxu0 %v2320
  %v2939 = vpop.f32.mrb[0].mxu0
  %v2940 = vadd.f32 %v2062, %v2939
  %v2941 = vpop.f32.mrb[0].mxu0
  %2942 = vmatprep.mubr.f32.mxu0 0.0
  %2943 = vmatmul.mubr.f32.gmra.mrb[0].mxu0 %v2323
  %v2944 = vpop.f32.mrb[0].mxu0
  %v2945 = vadd.f32 %v2062, %v2944
  %v2946 = vpop.f32.mrb[0].mxu0
  %2947 = vmatprep.mubr.f32.mxu0 0.0
  %2948 = vmatmul.mubr.f32.gmra.mrb[0].mxu0 %v2326
  %v2949 = vpop.f32.mrb[0].mxu0
  %v2950 = vadd.f32 %v2062, %v2949
  %v2951 = vpop.f32.mrb[0].mxu0
  %2952 = vmatprep.mubr.f32.mxu0 0.0
  %2953 = vmatmul.mubr.f32.gmra.mrb[0].mxu0 %v2329
  %v2954 = vpop.f32.mrb[0].mxu0
  %v2955 = vadd.f32 %v2062, %v2954
  %v2956 = vpop.f32.mrb[0].mxu0
  %2957 = vmatprep.mubr.f32.mxu0 0.0
  %2958 = vmatmul.mubr.f32.gmra.mrb[0].mxu0 %v2332
  %v2959 = vpop.f32.mrb[0].mxu0
  %v2960 = vadd.f32 %v2062, %v2959
  %v2961 = vpop.f32.mrb[0].mxu0
  %2962 = vmatprep.mubr.f32.mxu0 0.0
  %2963 = vmatmul.mubr.f32.gmra.mrb[0].mxu0 %v2335
  %v2964 = vpop.f32.mrb[0].mxu0
  %v2965 = vadd.f32 %v2062, %v2964
  %v2966 = vpop.f32.mrb[0].mxu0
  %2967 = vmatprep.mubr.f32.mxu0 0.0
  %2968 = vmatmul.mubr.f32.gmra.mrb[0].mxu0 %v2338
  %v2969 = vpop.f32.mrb[0].mxu0
  %v2970 = vadd.f32 %v2062, %v2969
  %v2971 = vpop.f32.mrb[0].mxu0
  %2972 = vmatprep.mubr.f32.mxu0 0.0
  %2973 = vmatmul.mubr.f32.gmra.mrb[0].mxu0 %v2341
  %v2974 = vpop.f32.mrb[0].mxu0
  %v2975 = vadd.f32 %v2062, %v2974
  %v2976 = vpop.f32.mrb[0].mxu0
  %2977 = vmatprep.mubr.f32.mxu0 0.0
  %2978 = vmatmul.mubr.f32.gmra.mrb[0].mxu0 %v2344
  %v2979 = vpop.f32.mrb[0].mxu0
  %v2980 = vadd.f32 %v2062, %v2979
  %v2981 = vpop.f32.mrb[0].mxu0
  %2982 = vmatprep.mubr.f32.mxu0 0.0
  %2983 = vmatmul.mubr.f32.gmra.mrb[0].mxu0 %v2347
  %v2984 = vpop.f32.mrb[0].mxu0
  %v2985 = vadd.f32 %v2062, %v2984
  %v2986 = vpop.f32.mrb[0].mxu0
  %2987 = vmatprep.mubr.f32.mxu0 0.0
  %2988 = vmatmul.mubr.f32.gmra.mrb[0].mxu0 %v2350
  %v2989 = vpop.f32.mrb[0].mxu0
  %v2990 = vadd.f32 %v2062, %v2989
  %v2991 = vpop.f32.mrb[0].mxu0
  %2992 = vmatprep.mubr.f32.mxu0 0.0
  %2993 = vmatmul.mubr.f32.gmra.mrb[0].mxu0 %v2353
  %v2994 = vpop.f32.mrb[0].mxu0
  %v2995 = vadd.f32 %v2062, %v2994
  %v2996 = vpop.f32.mrb[0].mxu0
  %2997 = vmatprep.mubr.f32.mxu0 0.0
  %2998 = vmatmul.mubr.f32.gmra.mrb[0].mxu0 %v2356
  %v2999 = vpop.f32.mrb[0].mxu0
  %v3000 = vadd.f32 %v2062, %v2999
  %v3001 = vpop.f32.mrb[0].mxu0
  %3002 = vmatprep.mubr.f32.mxu0 0.0
  %3003 = vmatmul.mubr.f32.gmra.mrb[0].mxu0 %v2359
  %v3004 = vpop.f32.mrb[0].mxu0
  %v3005 = vadd.f32 %v2062, %v3004
  %v3006 = vpop.f32.mrb[0].mxu0
  %3007 = vmatprep.mubr.f32.mxu0 0.0
  %3008 = vmatmul.mubr.f32.gmra.mrb[0].mxu0 %v2362
  %v3009 = vpop.f32.mrb[0].mxu0
  %v3010 = vadd.f32 %v2062, %v3009
  %v3011 = vpop.f32.mrb[0].mxu0
  %3012 = vmatprep.mubr.f32.mxu0 0.0
  %3013 = vmatmul.mubr.f32.gmra.mrb[0].mxu0 %v2365
  %v3014 = vpop.f32.mrb[0].mxu0
  %v3015 = vadd.f32 %v2062, %v3014
  %v3016 = vpop.f32.mrb[0].mxu0
  %3017 = vmatprep.mubr.f32.mxu0 0.0
  %3018 = vmatmul.mubr.f32.gmra.mrb[0].mxu0 %v2368
  %v3019 = vpop.f32.mrb[0].mxu0
  %v3020 = vadd.f32 %v2062, %v3019
  %v3021 = vpop.f32.mrb[0].mxu0
  %3022 = vmatprep.mubr.f32.mxu0 0.0
  %3023 = vmatmul.mubr.f32.gmra.mrb[0].mxu0 %v2371
  %v3024 = vpop.f32.mrb[0].mxu0
  %v3025 = vadd.f32 %v2062, %v3024
  %v3026 = vpop.f32.mrb[0].mxu0
  %3027 = vmatprep.mubr.f32.mxu0 0.0
  %3028 = vmatmul.mubr.f32.gmra.mrb[0].mxu0 %v2374
  %v3029 = vpop.f32.mrb[0].mxu0
  %v3030 = vadd.f32 %v2062, %v3029
  %v3031 = vpop.f32.mrb[0].mxu0
  %3032 = vmatprep.mubr.f32.mxu0 0.0
  %3033 = vmatmul.mubr.f32.gmra.mrb[0].mxu0 %v2377
  %v3034 = vpop.f32.mrb[0].mxu0
  %v3035 = vadd.f32 %v2062, %v3034
  %v3036 = vpop.f32.mrb[0].mxu0
  %3037 = vmatprep.mubr.f32.mxu0 0.0
  %3038 = vmatmul.mubr.f32.gmra.mrb[0].mxu0 %v2380
  %v3039 = vpop.f32.mrb[0].mxu0
  %v3040 = vadd.f32 %v2062, %v3039
  %v3041 = vpop.f32.mrb[0].mxu0
  %3042 = vmatprep.mubr.f32.mxu0 0.0
  %3043 = vmatmul.mubr.f32.gmra.mrb[0].mxu0 %v2383
  %v3044 = vpop.f32.mrb[0].mxu0
  %v3045 = vadd.f32 %v2062, %v3044
  %v3046 = vpop.f32.mrb[0].mxu0
  %3047 = vmatprep.mubr.f32.mxu0 0.0
  %3048 = vmatmul.mubr.f32.gmra.mrb[0].mxu0 %v2386
  %v3049 = vpop.f32.mrb[0].mxu0
  %v3050 = vadd.f32 %v2062, %v3049
  %v3051 = vpop.f32.mrb[0].mxu0
  %3052 = vmatprep.mubr.f32.mxu0 0.0
  %3053 = vmatmul.mubr.f32.gmra.mrb[0].mxu0 %v2389
  %v3054 = vpop.f32.mrb[0].mxu0
  %v3055 = vadd.f32 %v2062, %v3054
  %v3056 = vpop.f32.mrb[0].mxu0
  %3057 = vmatprep.mubr.f32.mxu0 0.0
  %3058 = vmatmul.mubr.f32.gmra.mrb[0].mxu0 %v2392
  %v3059 = vpop.f32.mrb[0].mxu0
  %v3060 = vadd.f32 %v2062, %v3059
  %v3061 = vpop.f32.mrb[0].mxu0
  %3062 = vmatprep.mubr.f32.mxu0 0.0
  %3063 = vmatmul.mubr.f32.gmra.mrb[0].mxu0 %v2395
  %v3064 = vpop.f32.mrb[0].mxu0
  %v3065 = vadd.f32 %v2062, %v3064
  %v3066 = vpop.f32.mrb[0].mxu0
  %3067 = vmatprep.mubr.f32.mxu0 0.0
  %3068 = vmatmul.mubr.f32.gmra.mrb[0].mxu0 %v2398
  %v3069 = vpop.f32.mrb[0].mxu0
  %v3070 = vadd.f32 %v2062, %v3069
  %v3071 = vpop.f32.mrb[0].mxu0
  %3072 = vmatprep.mubr.f32.mxu0 0.0
  %3073 = vmatmul.mubr.f32.gmra.mrb[0].mxu0 %v2401
  %v3074 = vpop.f32.mrb[0].mxu0
  %v3075 = vadd.f32 %v2062, %v3074
  %v3076 = vpop.f32.mrb[0].mxu0
  %3077 = vmatprep.mubr.f32.mxu0 0.0
  %3078 = vmatmul.mubr.f32.gmra.mrb[0].mxu0 %v2404
  %v3079 = vpop.f32.mrb[0].mxu0
  %v3080 = vadd.f32 %v2062, %v3079
  %v3081 = vpop.f32.mrb[0].mxu0
  %3082 = vmatprep.mubr.f32.mxu0 0.0
  %3083 = vmatmul.mubr.f32.gmra.mrb[0].mxu0 %v2407
  %v3084 = vpop.f32.mrb[0].mxu0
  %v3085 = vadd.f32 %v2062, %v3084
  %v3086 = vpop.f32.mrb[0].mxu0
  %3087 = vmatprep.mubr.f32.mxu0 0.0
  %3088 = vmatmul.mubr.f32.gmra.mrb[0].mxu0 %v2410
  %v3089 = vpop.f32.mrb[0].mxu0
  %v3090 = vadd.f32 %v2062, %v3089
  %v3091 = vpop.f32.mrb[0].mxu0
  %3092 = vmatprep.mubr.f32.mxu0 0.0
  %3093 = vmatmul.mubr.f32.gmra.mrb[0].mxu0 %v2413
  %v3094 = vpop.f32.mrb[0].mxu0
  %v3095 = vadd.f32 %v2062, %v3094
  %v3096 = vpop.f32.mrb[0].mxu0
  %3097 = vmatprep.mubr.f32.mxu0 0.0
  %3098 = vmatmul.mubr.f32.gmra.mrb[0].mxu0 %v2416
  %v3099 = vpop.f32.mrb[0].mxu0
  %v3100 = vadd.f32 %v2062, %v3099
  %v3101 = vpop.f32.mrb[0].mxu0
  %3102 = vmatprep.mubr.f32.mxu0 0.0
  %3103 = vmatmul.mubr.f32.gmra.mrb[0].mxu0 %v2419
  %v3104 = vpop.f32.mrb[0].mxu0
  %v3105 = vadd.f32 %v2062, %v3104
  %v3106 = vpop.f32.mrb[0].mxu0
  %3107 = vmatprep.mubr.f32.mxu0 0.0
  %3108 = vmatmul.mubr.f32.gmra.mrb[0].mxu0 %v2422
  %v3109 = vpop.f32.mrb[0].mxu0
  %v3110 = vadd.f32 %v2062, %v3109
  %v3111 = vpop.f32.mrb[0].mxu0
  %3112 = vmatprep.mubr.f32.mxu0 0.0
  %3113 = vmatmul.mubr.f32.gmra.mrb[0].mxu0 %v2425
  %v3114 = vpop.f32.mrb[0].mxu0
  %v3115 = vadd.f32 %v2062, %v3114
  %v3116 = vpop.f32.mrb[0].mxu0
  %3117 = vmatprep.mubr.f32.mxu0 0.0
  %3118 = vmatmul.mubr.f32.gmra.mrb[0].mxu0 %v2428
  %v3119 = vpop.f32.mrb[0].mxu0
  %v3120 = vadd.f32 %v2062, %v3119
  %v3121 = vpop.f32.mrb[0].mxu0
  %3122 = vmatprep.mubr.f32.mxu0 0.0
  %3123 = vmatmul.mubr.f32.gmra.mrb[0].mxu0 %v2431
  %v3124 = vpop.f32.mrb[0].mxu0
  %v3125 = vadd.f32 %v2062, %v3124
  %v3126 = vpop.f32.mrb[0].mxu0
  %3127 = vmatprep.mubr.f32.mxu0 0.0
  %3128 = vmatmul.mubr.f32.gmra.mrb[0].mxu0 %v2434
  %v3129 = vpop.f32.mrb[0].mxu0
  %v3130 = vadd.f32 %v2062, %v3129
  %v3131 = vpop.f32.mrb[0].mxu0
  %3132 = vmatprep.mubr.f32.mxu0 0.0
  %3133 = vmatmul.mubr.f32.gmra.mrb[0].mxu0 %v2437
  %v3134 = vpop.f32.mrb[0].mxu0
  %v3135 = vadd.f32 %v2062, %v3134
  %v3136 = vpop.f32.mrb[0].mxu0
  %3137 = vmatprep.mubr.f32.mxu0 0.0
  %3138 = vmatmul.mubr.f32.gmra.mrb[0].mxu0 %v2440
  %v3139 = vpop.f32.mrb[0].mxu0
  %v3140 = vadd.f32 %v2062, %v3139
  %v3141 = vpop.f32.mrb[0].mxu0
  %3142 = vmatprep.mubr.f32.mxu0 0.0
  %3143 = vmatmul.mubr.f32.gmra.mrb[0].mxu0 %v2443
  %v3144 = vpop.f32.mrb[0].mxu0
  %v3145 = vadd.f32 %v2062, %v3144
  %v3146 = vpop.f32.mrb[0].mxu0
  %3147 = vmatprep.mubr.f32.mxu0 0.0
  %3148 = vmatmul.mubr.f32.gmra.mrb[0].mxu0 %v2446
  %v3149 = vpop.f32.mrb[0].mxu0
  %v3150 = vadd.f32 %v2062, %v3149
  %v3151 = vpop.f32.mrb[0].mxu0
  %3152 = vdwg.mxu0
  %vm3153 = vcmask 31744
  %3154 = vst.msk [vmem:[%s7] sm:$0xff] %vm3153, %v2515
  %3155 = vst.msk [vmem:[%s7 + $0x8] sm:$0xff] %vm3153, %v2520
  %3156 = vst.msk [vmem:[%s7 + $0x10] sm:$0xff] %vm3153, %v2525
  %3157 = vst.msk [vmem:[%s7 + $0x18] sm:$0xff] %vm3153, %v2530
  %3158 = vst.msk [vmem:[%s7 + $0x20] sm:$0xff] %vm3153, %v2535
  %3159 = vst.msk [vmem:[%s7 + $0x28] sm:$0xff] %vm3153, %v2540
  %3160 = vst.msk [vmem:[%s7 + $0x30] sm:$0xff] %vm3153, %v2545
  %3161 = vst.msk [vmem:[%s7 + $0x38] sm:$0xff] %vm3153, %v2550
  %3162 = vst.msk [vmem:[%s7 + $0x40] sm:$0xff] %vm3153, %v2555
  %3163 = vst.msk [vmem:[%s7 + $0x48] sm:$0xff] %vm3153, %v2560
  %3164 = vst.msk [vmem:[%s7 + $0x50] sm:$0xff] %vm3153, %v2565
  %3165 = vst.msk [vmem:[%s7 + $0x58] sm:$0xff] %vm3153, %v2570
  %3166 = vst.msk [vmem:[%s7 + $0x60] sm:$0xff] %vm3153, %v2575
  %3167 = vst.msk [vmem:[%s7 + $0x68] sm:$0xff] %vm3153, %v2580
  %3168 = vst.msk [vmem:[%s7 + $0x70] sm:$0xff] %vm3153, %v2585
  %3169 = vst.msk [vmem:[%s7 + $0x78] sm:$0xff] %vm3153, %v2590
  %3170 = vst.msk [vmem:[%s7 + $0x80] sm:$0xff] %vm3153, %v2595
  %3171 = vst.msk [vmem:[%s7 + $0x88] sm:$0xff] %vm3153, %v2600
  %3172 = vst.msk [vmem:[%s7 + $0x90] sm:$0xff] %vm3153, %v2605
  %3173 = vst.msk [vmem:[%s7 + $0x98] sm:$0xff] %vm3153, %v2610
  %3174 = vst.msk [vmem:[%s7 + $0xa0] sm:$0xff] %vm3153, %v2615
  %3175 = vst.msk [vmem:[%s7 + $0xa8] sm:$0xff] %vm3153, %v2620
  %3176 = vst.msk [vmem:[%s7 + $0xb0] sm:$0xff] %vm3153, %v2625
  %3177 = vst.msk [vmem:[%s7 + $0xb8] sm:$0xff] %vm3153, %v2630
  %3178 = vst.msk [vmem:[%s7 + $0xc0] sm:$0xff] %vm3153, %v2635
  %3179 = vst.msk [vmem:[%s7 + $0xc8] sm:$0xff] %vm3153, %v2640
  %3180 = vst.msk [vmem:[%s7 + $0xd0] sm:$0xff] %vm3153, %v2645
  %3181 = vst.msk [vmem:[%s7 + $0xd8] sm:$0xff] %vm3153, %v2650
  %3182 = vst.msk [vmem:[%s7 + $0xe0] sm:$0xff] %vm3153, %v2655
  %3183 = vst.msk [vmem:[%s7 + $0xe8] sm:$0xff] %vm3153, %v2660
  %3184 = vst.msk [vmem:[%s7 + $0xf0] sm:$0xff] %vm3153, %v2665
  %3185 = vst.msk [vmem:[%s7 + $0xf8] sm:$0xff] %vm3153, %v2670
  %3186 = vst.msk [vmem:[%s7 + $0x100] sm:$0xff] %vm3153, %v2675
  %3187 = vst.msk [vmem:[%s7 + $0x108] sm:$0xff] %vm3153, %v2680
  %3188 = vst.msk [vmem:[%s7 + $0x110] sm:$0xff] %vm3153, %v2685
  %3189 = vst.msk [vmem:[%s7 + $0x118] sm:$0xff] %vm3153, %v2690
  %3190 = vst.msk [vmem:[%s7 + $0x120] sm:$0xff] %vm3153, %v2695
  %3191 = vst.msk [vmem:[%s7 + $0x128] sm:$0xff] %vm3153, %v2700
  %3192 = vst.msk [vmem:[%s7 + $0x130] sm:$0xff] %vm3153, %v2705
  %3193 = vst.msk [vmem:[%s7 + $0x138] sm:$0xff] %vm3153, %v2710
  %3194 = vst.msk [vmem:[%s7 + $0x140] sm:$0xff] %vm3153, %v2715
  %3195 = vst.msk [vmem:[%s7 + $0x148] sm:$0xff] %vm3153, %v2720
  %3196 = vst.msk [vmem:[%s7 + $0x150] sm:$0xff] %vm3153, %v2725
  %3197 = vst.msk [vmem:[%s7 + $0x158] sm:$0xff] %vm3153, %v2730
  %3198 = vst.msk [vmem:[%s7 + $0x160] sm:$0xff] %vm3153, %v2735
  %3199 = vst.msk [vmem:[%s7 + $0x168] sm:$0xff] %vm3153, %v2740
  %3200 = vst.msk [vmem:[%s7 + $0x170] sm:$0xff] %vm3153, %v2745
  %3201 = vst.msk [vmem:[%s7 + $0x178] sm:$0xff] %vm3153, %v2750
  %3202 = vst.msk [vmem:[%s7 + $0x180] sm:$0xff] %vm3153, %v2755
  %3203 = vst.msk [vmem:[%s7 + $0x188] sm:$0xff] %vm3153, %v2760
  %3204 = vst.msk [vmem:[%s7 + $0x190] sm:$0xff] %vm3153, %v2765
  %3205 = vst.msk [vmem:[%s7 + $0x198] sm:$0xff] %vm3153, %v2770
  %3206 = vst.msk [vmem:[%s7 + $0x1a0] sm:$0xff] %vm3153, %v2775
  %3207 = vst.msk [vmem:[%s7 + $0x1a8] sm:$0xff] %vm3153, %v2780
  %3208 = vst.msk [vmem:[%s7 + $0x1b0] sm:$0xff] %vm3153, %v2785
  %3209 = vst.msk [vmem:[%s7 + $0x1b8] sm:$0xff] %vm3153, %v2790
  %3210 = vst.msk [vmem:[%s7 + $0x1c0] sm:$0xff] %vm3153, %v2795
  %3211 = vst.msk [vmem:[%s7 + $0x1c8] sm:$0xff] %vm3153, %v2800
  %3212 = vst.msk [vmem:[%s7 + $0x1d0] sm:$0xff] %vm3153, %v2805
  %3213 = vst.msk [vmem:[%s7 + $0x1d8] sm:$0xff] %vm3153, %v2810
  %3214 = vst.msk [vmem:[%s7 + $0x1e0] sm:$0xff] %vm3153, %v2815
  %3215 = vst.msk [vmem:[%s7 + $0x1e8] sm:$0xff] %vm3153, %v2820
  %3216 = vst.msk [vmem:[%s7 + $0x1f0] sm:$0xff] %vm3153, %v2825
  %3217 = vst.msk [vmem:[%s7 + $0x1f8] sm:$0xff] %vm3153, %v2830
  %3218 = vst.msk [vmem:[%s7 + $0x200] sm:$0xff] %vm3153, %v2835
  %3219 = vst.msk [vmem:[%s7 + $0x208] sm:$0xff] %vm3153, %v2840
  %3220 = vst.msk [vmem:[%s7 + $0x210] sm:$0xff] %vm3153, %v2845
  %3221 = vst.msk [vmem:[%s7 + $0x218] sm:$0xff] %vm3153, %v2850
  %3222 = vst.msk [vmem:[%s7 + $0x220] sm:$0xff] %vm3153, %v2855
  %3223 = vst.msk [vmem:[%s7 + $0x228] sm:$0xff] %vm3153, %v2860
  %3224 = vst.msk [vmem:[%s7 + $0x230] sm:$0xff] %vm3153, %v2865
  %3225 = vst.msk [vmem:[%s7 + $0x238] sm:$0xff] %vm3153, %v2870
  %3226 = vst.msk [vmem:[%s7 + $0x240] sm:$0xff] %vm3153, %v2875
  %3227 = vst.msk [vmem:[%s7 + $0x248] sm:$0xff] %vm3153, %v2880
  %3228 = vst.msk [vmem:[%s7 + $0x250] sm:$0xff] %vm3153, %v2885
  %3229 = vst.msk [vmem:[%s7 + $0x258] sm:$0xff] %vm3153, %v2890
  %3230 = vst.msk [vmem:[%s7 + $0x260] sm:$0xff] %vm3153, %v2895
  %3231 = vst.msk [vmem:[%s7 + $0x268] sm:$0xff] %vm3153, %v2900
  %3232 = vst.msk [vmem:[%s7 + $0x270] sm:$0xff] %vm3153, %v2905
  %3233 = vst.msk [vmem:[%s7 + $0x278] sm:$0xff] %vm3153, %v2910
  %3234 = vst.msk [vmem:[%s7 + $0x280] sm:$0xff] %vm3153, %v2915
  %3235 = vst.msk [vmem:[%s7 + $0x288] sm:$0xff] %vm3153, %v2920
  %3236 = vst.msk [vmem:[%s7 + $0x290] sm:$0xff] %vm3153, %v2925
  %3237 = vst.msk [vmem:[%s7 + $0x298] sm:$0xff] %vm3153, %v2930
  %3238 = vst.msk [vmem:[%s7 + $0x2a0] sm:$0xff] %vm3153, %v2935
  %3239 = vst.msk [vmem:[%s7 + $0x2a8] sm:$0xff] %vm3153, %v2940
  %3240 = vst.msk [vmem:[%s7 + $0x2b0] sm:$0xff] %vm3153, %v2945
  %3241 = vst.msk [vmem:[%s7 + $0x2b8] sm:$0xff] %vm3153, %v2950
  %3242 = vst.msk [vmem:[%s7 + $0x2c0] sm:$0xff] %vm3153, %v2955
  %3243 = vst.msk [vmem:[%s7 + $0x2c8] sm:$0xff] %vm3153, %v2960
  %3244 = vst.msk [vmem:[%s7 + $0x2d0] sm:$0xff] %vm3153, %v2965
  %3245 = vst.msk [vmem:[%s7 + $0x2d8] sm:$0xff] %vm3153, %v2970
  %3246 = vst.msk [vmem:[%s7 + $0x2e0] sm:$0xff] %vm3153, %v2975
  %3247 = vst.msk [vmem:[%s7 + $0x2e8] sm:$0xff] %vm3153, %v2980
  %3248 = vst.msk [vmem:[%s7 + $0x2f0] sm:$0xff] %vm3153, %v2985
  %3249 = vst.msk [vmem:[%s7 + $0x2f8] sm:$0xff] %vm3153, %v2990
  %3250 = vst.msk [vmem:[%s7 + $0x300] sm:$0xff] %vm3153, %v2995
  %3251 = vst.msk [vmem:[%s7 + $0x308] sm:$0xff] %vm3153, %v3000
  %3252 = vst.msk [vmem:[%s7 + $0x310] sm:$0xff] %vm3153, %v3005
  %3253 = vst.msk [vmem:[%s7 + $0x318] sm:$0xff] %vm3153, %v3010
  %3254 = vst.msk [vmem:[%s7 + $0x320] sm:$0xff] %vm3153, %v3015
  %3255 = vst.msk [vmem:[%s7 + $0x328] sm:$0xff] %vm3153, %v3020
  %3256 = vst.msk [vmem:[%s7 + $0x330] sm:$0xff] %vm3153, %v3025
  %3257 = vst.msk [vmem:[%s7 + $0x338] sm:$0xff] %vm3153, %v3030
  %3258 = vst.msk [vmem:[%s7 + $0x340] sm:$0xff] %vm3153, %v3035
  %3259 = vst.msk [vmem:[%s7 + $0x348] sm:$0xff] %vm3153, %v3040
  %3260 = vst.msk [vmem:[%s7 + $0x350] sm:$0xff] %vm3153, %v3045
  %3261 = vst.msk [vmem:[%s7 + $0x358] sm:$0xff] %vm3153, %v3050
  %3262 = vst.msk [vmem:[%s7 + $0x360] sm:$0xff] %vm3153, %v3055
  %3263 = vst.msk [vmem:[%s7 + $0x368] sm:$0xff] %vm3153, %v3060
  %3264 = vst.msk [vmem:[%s7 + $0x370] sm:$0xff] %vm3153, %v3065
  %3265 = vst.msk [vmem:[%s7 + $0x378] sm:$0xff] %vm3153, %v3070
  %3266 = vst.msk [vmem:[%s7 + $0x380] sm:$0xff] %vm3153, %v3075
  %3267 = vst.msk [vmem:[%s7 + $0x388] sm:$0xff] %vm3153, %v3080
  %3268 = vst.msk [vmem:[%s7 + $0x390] sm:$0xff] %vm3153, %v3085
  %3269 = vst.msk [vmem:[%s7 + $0x398] sm:$0xff] %vm3153, %v3090
  %3270 = vst.msk [vmem:[%s7 + $0x3a0] sm:$0xff] %vm3153, %v3095
  %3271 = vst.msk [vmem:[%s7 + $0x3a8] sm:$0xff] %vm3153, %v3100
  %3272 = vst.msk [vmem:[%s7 + $0x3b0] sm:$0xff] %vm3153, %v3105
  %3273 = vst.msk [vmem:[%s7 + $0x3b8] sm:$0xff] %vm3153, %v3110
  %3274 = vst.msk [vmem:[%s7 + $0x3c0] sm:$0xff] %vm3153, %v3115
  %3275 = vst.msk [vmem:[%s7 + $0x3c8] sm:$0xff] %vm3153, %v3120
  %3276 = vst.msk [vmem:[%s7 + $0x3d0] sm:$0xff] %vm3153, %v3125
  %3277 = vst.msk [vmem:[%s7 + $0x3d8] sm:$0xff] %vm3153, %v3130
  %3278 = vst.msk [vmem:[%s7 + $0x3e0] sm:$0xff] %vm3153, %v3135
  %3279 = vst.msk [vmem:[%s7 + $0x3e8] sm:$0xff] %vm3153, %v3140
  %3280 = vst.msk [vmem:[%s7 + $0x3f0] sm:$0xff] %vm3153, %v3145
  %3281 = vst.msk [vmem:[%s7 + $0x3f8] sm:$0xff] %vm3153, %v3150
  // Predicated region
  $region30: #{tpu_custom_call.1} parent=0 // pred_check
    _
  $region31: #{tpu_custom_call.1} parent=0 // pred_check_branch
    %3283 = sbr.rel (0) target = $region33
  $region32: #{tpu_custom_call.1} parent=0 // pred_region
    _
  $region33: #{tpu_custom_call.1} parent=0 // pred_fallthru
    _
  // Predicated region
  $region34: #{tpu_custom_call.1} parent=0 // pred_check
    _
  $region35: #{tpu_custom_call.1} parent=0 // pred_check_branch
    %3285 = sbr.rel (0) target = $region37
  $region36: #{tpu_custom_call.1} parent=0 // pred_region
    _
  $region37: #{tpu_custom_call.1} parent=0 // pred_fallthru
    _

</llo_original>
